<compile_context>
chip_gen: v7x
topology: tpu7x:2x2x1
jax: 0.10.0
libtpu: 0.0.40
codegen_flags: <defaults>
</compile_context>

<pallas_src>
import math
import numpy as np
import jax
import jax.numpy as jnp
from jax import lax
from jax.experimental import pallas as pl
from jax.experimental.pallas import tpu as pltpu

EPS = 1e-5


def fold_bn(gamma, beta, running_mean, running_var, eps=EPS):
    """Inference-mode BatchNorm folded to per-channel (scale, bias), shape (C,)."""
    scale = gamma / jnp.sqrt(running_var + eps)
    bias = beta - running_mean * scale
    return scale, bias


def _round_up(v, m):
    return (v + m - 1) // m * m


def _pick_tile_rows(H, W, target_lanes=1024):
    """Rows per spatial tile such that (rows*W) is a multiple of 128 (unmasked
    output stores) and the tile carries ~1-2K lanes; fall back to the full image."""
    cands = [tr for tr in range(1, H + 1) if (tr * W) % 128 == 0]
    if not cands:
        return H
    for tr in cands:
        if tr * W >= target_lanes:
            return tr
    return cands[-1]


def _vmem_limit_bytes():
    """Per-generation VMEM budget (<= ~48 MiB on 64 MiB v7x, <= 96 MiB on 128 MiB v5e/v6e)."""
    try:
        cap = int(pltpu.get_tpu_info().vmem_capacity_bytes)
    except Exception:
        cap = 128 * 1024 * 1024
    return int(max(32 * 1024 * 1024, min(cap * 3 // 4, 96 * 1024 * 1024)))


def _pad_rows(a, rows):
    out = jnp.zeros((rows,) + a.shape[1:], a.dtype)
    return out.at[: a.shape[0]].set(a)


def _make_kernel(W, TR, TIN_pad, Cmid_p):
    TRW = TR * W

    def kernel(x_hbm, m_ref, w1_ref, b1_ref, w2_ref, b2_ref, w3_ref, b3_ref,
               o_ref, xbuf, col, sem):
        n = pl.program_id(0)
        t = pl.program_id(1)
        n_tiles = pl.num_programs(1)
        slot = t % 2

        def start_fetch(tile_idx, s):
            start = tile_idx * TRW
            if TRW % 128 == 0:
                start = pl.multiple_of(start, 128)
            pltpu.make_async_copy(
                x_hbm.at[n, :, pl.ds(start, TIN_pad)],
                xbuf.at[s], sem.at[s]).start()

        # Prime the pipeline at the first tile of each image.
        @pl.when(t == 0)
        def _():
            start_fetch(0, 0)

        # Prefetch the next tile (same image) into the other slot.
        @pl.when(t + 1 < n_tiles)
        def _():
            start_fetch(t + 1, 1 - slot)

        # Wait for the current tile's halo'd x window.
        pltpu.make_async_copy(
            x_hbm.at[n, :, pl.ds(0, TIN_pad)], xbuf.at[slot], sem.at[slot]).wait()

        x = xbuf[slot]                                   # (Cin, TIN_pad) bf16
        m = m_ref[0]                                     # (9, TIN_pad) bf16 0/1

        # ---- conv1 (1x1) + bn1 + relu (BN scale folded into w1) ----
        h1 = jnp.dot(w1_ref[...], x, preferred_element_type=jnp.float32)
        h1 = jnp.maximum(h1 + b1_ref[...], 0.0)          # (Cmid_p, TIN_pad) f32

        # ---- conv2 (3x3, pad=1): 9 lane-rolls -> bf16 im2col scratch -> 1 matmul ----
        for kh in range(3):
            for kw in range(3):
                tap = kh * 3 + kw
                off = (kh - 1) * W + (kw - 1)            # flattened spatial shift
                v = h1 if off == 0 else pltpu.roll(h1, shift=(-off) % TIN_pad, axis=1)
                if not (kh == 1 and kw == 1):            # center tap needs no mask
                    v = v * m[tap:tap + 1, :]            # f32 multiply, bf16 store
                col[tap * Cmid_p:(tap + 1) * Cmid_p, :] = v.astype(jnp.bfloat16)
        h2 = jnp.dot(w2_ref[...], col[...], preferred_element_type=jnp.float32)
        h2 = jnp.maximum(h2 + b2_ref[...], 0.0)          # (Cmid_p, TIN_pad) f32

        # ---- conv3 (1x1) + bn3, residual add, relu ----
        h3 = jnp.dot(w3_ref[...], h2.astype(jnp.bfloat16),
                     preferred_element_type=jnp.float32)
        h3 = h3 + b3_ref[...] + x.astype(jnp.float32)    # residual in f32
        h3 = jnp.maximum(h3, 0.0)
        # Bring the TR central rows (lanes [W, W+TRW)) to lane 0 and store the
        # 128-aligned prefix -> unmasked output stores.
        h3 = pltpu.roll(h3, shift=TIN_pad - W, axis=1)
        o_ref[0] = h3[:, :TRW].astype(o_ref.dtype)

    return kernel


def bottleneck_forward(x_nchw, w1, s1, b1, w2, s2, b2, w3, s3, b3,
                       tile_rows=None, out_dtype=jnp.bfloat16):
    """x_nchw: (N, Cin, H, W) f32.  w1:(Cmid,Cin), w2:(Cmid,Cmid,3,3) OIHW,
    w3:(Cout,Cmid).  s*/b* are folded inference-BN scale/bias, shape (C,).
    Returns (N, Cout, H, W) in `out_dtype` (bf16 by default to halve HBM traffic)."""
    N, Cin, H, W = x_nchw.shape
    Cmid = w1.shape[0]
    Cout = w3.shape[0]
    assert Cout == Cin, "residual add needs in_channels == out_channels * 4"

    # ---- tiling parameters ----
    TR = tile_rows if tile_rows is not None else _pick_tile_rows(H, W)
    TR = min(TR, H)
    if (TR * W) % 128 != 0:
        TR = H                                  # single tile per image (fallback)
    n_tiles = -(-H // TR)
    H_eff = n_tiles * TR
    TRW = TR * W                                # output lanes per tile
    TIN = (TR + 2) * W                          # halo'd input lanes per tile
    TIN_pad = _round_up(TIN, 128)               # aligned extent for rolls/DMAs
    Cmid_p = _round_up(Cmid, 16)                # sublane-aligned bf16 im2col slabs

    # ---- fold BN scales into conv weights; pad Cmid to Cmid_p with zeros ----
    w1f = _pad_rows(s1[:, None] * w1, Cmid_p).astype(jnp.bfloat16)        # (Cmid_p, Cin)
    b1c = _pad_rows(b1[:, None], Cmid_p)                                   # (Cmid_p, 1) f32
    w2t = s2[:, None, None, None] * jnp.transpose(w2, (0, 2, 3, 1))        # (O,kh,kw,I)
    w2p = jnp.zeros((Cmid_p, 3, 3, Cmid_p), w2.dtype).at[:Cmid, :, :, :Cmid].set(w2t)
    w2f = w2p.reshape(Cmid_p, 9 * Cmid_p).astype(jnp.bfloat16)             # (Cmid_p, 9*Cmid_p)
    b2c = _pad_rows(b2[:, None], Cmid_p)                                   # (Cmid_p, 1) f32
    w3f = (jnp.zeros((Cout, Cmid_p), w3.dtype)
           .at[:, :Cmid].set(s3[:, None] * w3)).astype(jnp.bfloat16)       # (Cout, Cmid_p)
    b3c = b3[:, None]                                                      # (Cout, 1) f32

    # ---- bf16 activations in HBM, one zero halo row top/bottom, lane pad so every
    #      tile's TIN_pad-lane DMA window stays in bounds ----
    x_pad = jnp.pad(x_nchw, ((0, 0), (0, 0), (1, H_eff - H + 1), (0, 0)))
    x_flat = x_pad.reshape(N, Cin, (H_eff + 2) * W)
    need_lanes = (n_tiles - 1) * TRW + TIN_pad
    extra = need_lanes - x_flat.shape[-1]
    if extra > 0:
        x_flat = jnp.pad(x_flat, ((0, 0), (0, 0), (0, extra)))
    x_flat = x_flat.astype(jnp.bfloat16)

    # ---- per-tile 0/1 boundary masks for the nine 3x3 taps (bf16, numpy const) ----
    masks_np = np.zeros((n_tiles, 9, TIN_pad), np.float32)
    rr = np.arange(TR + 2)[:, None]
    cc = np.arange(W)[None, :]
    for ti in range(n_tiles):
        orow = ti * TR + rr - 1                     # original image row of each local row
        for i, dh in enumerate((-1, 0, 1)):
            for j, dw in enumerate((-1, 0, 1)):
                valid = ((orow + dh >= 0) & (orow + dh < H) &
                         (cc + dw >= 0) & (cc + dw < W))
                masks_np[ti, i * 3 + j, :TIN] = valid.reshape(-1).astype(np.float32)
    masks = jnp.asarray(masks_np, dtype=jnp.bfloat16)

    kernel = _make_kernel(W, TR, TIN_pad, Cmid_p)

    def _resident(arr):
        nd = arr.ndim
        return pl.BlockSpec(arr.shape, lambda n, t, _nd=nd: (0,) * _nd)

    flops = 2 * N * n_tiles * TIN_pad * (Cin * Cmid_p + 9 * Cmid_p * Cmid_p
                                         + Cmid_p * Cout)
    bytes_acc = (2 * N * n_tiles * Cin * TIN_pad          # bf16 x reads (incl. halo)
                 + 2 * N * Cout * H_eff * W               # bf16 out writes
                 + 2 * N * n_tiles * 9 * TIN_pad          # bf16 mask blocks
                 + 2 * (w1f.size + w2f.size + w3f.size)
                 + 4 * (b1c.size + b2c.size + b3c.size))

    out = pl.pallas_call(
        kernel,
        out_shape=jax.ShapeDtypeStruct((N, Cout, H_eff * W), out_dtype),
        grid=(N, n_tiles),
        in_specs=[
            pl.BlockSpec(memory_space=pl.ANY),                        # x (manual halo DMA)
            pl.BlockSpec((1, 9, TIN_pad), lambda n, t: (t, 0, 0)),    # per-tile masks
            _resident(w1f), _resident(b1c),
            _resident(w2f), _resident(b2c),
            _resident(w3f), _resident(b3c),
        ],
        out_specs=pl.BlockSpec((1, Cout, TRW), lambda n, t: (n, 0, t)),
        scratch_shapes=[
            pltpu.VMEM((2, Cin, TIN_pad), jnp.bfloat16),              # x double buffer
            pltpu.VMEM((9 * Cmid_p, TIN_pad), jnp.bfloat16),          # bf16 im2col
            pltpu.SemaphoreType.DMA((2,)),
        ],
        compiler_params=pltpu.CompilerParams(
            dimension_semantics=("parallel", "arbitrary"),
            vmem_limit_bytes=_vmem_limit_bytes()),
        cost_estimate=pl.CostEstimate(
            flops=int(flops), transcendentals=0, bytes_accessed=int(bytes_acc)),
    )(x_flat, masks, w1f, b1c, w2f, b2c, w3f, b3c)

    out = out.reshape(N, Cout, H_eff, W)
    if H_eff != H:
        out = out[:, :, :H, :]
    return out


def reference_forward(x_nchw, w1, s1, b1, w2, s2, b2, w3, s3, b3):
    """Plain-JAX NCHW reference (f32, highest precision) for verification."""
    def conv(h, w, pad):
        return lax.conv_general_dilated(
            h, w, window_strides=(1, 1), padding=[(pad, pad), (pad, pad)],
            dimension_numbers=("NCHW", "OIHW", "NCHW"),
            precision=lax.Precision.HIGHEST)

    def bn(h, s, b):
        return h * s[None, :, None, None] + b[None, :, None, None]

    identity = x_nchw
    h = jnp.maximum(bn(conv(x_nchw, w1[:, :, None, None], 0), s1, b1), 0.0)
    h = jnp.maximum(bn(conv(h, w2, 1), s2, b2), 0.0)
    h = bn(conv(h, w3[:, :, None, None], 0), s3, b3)
    return jnp.maximum(h + identity, 0.0)


if __name__ == "__main__":
    # batch=2, out_channels=4 (expansion 4x -> 16), spatial 16x16, NCHW input.
    N, H, W = 2, 16, 16
    out_channels = 4
    Cmid = out_channels
    Cin = out_channels * 4          # required for downsample=None residual add
    Cout = out_channels * 4

    key = jax.random.PRNGKey(0)
    keys = jax.random.split(key, 8)

    x = jax.random.normal(keys[0], (N, Cin, H, W), jnp.float32)           # NCHW

    # Conv weights (synthetic, deterministic).  1x1 weights as (Cout, Cin),
    # 3x3 weight in PyTorch OIHW layout (Cmid, Cmid, 3, 3).
    w1 = 0.1 * jax.random.normal(keys[1], (Cmid, Cin), jnp.float32)
    w2 = 0.1 * jax.random.normal(keys[2], (Cmid, Cmid, 3, 3), jnp.float32)
    w3 = 0.1 * jax.random.normal(keys[3], (Cout, Cmid), jnp.float32)

    # BatchNorm params (inference mode; running stats), deterministic.
    def bn_params(k, c):
        k1, k2, k3, k4 = jax.random.split(k, 4)
        gamma = 1.0 + 0.1 * jax.random.normal(k1, (c,), jnp.float32)
        beta = 0.1 * jax.random.normal(k2, (c,), jnp.float32)
        mean = 0.1 * jax.random.normal(k3, (c,), jnp.float32)
        var = jax.random.uniform(k4, (c,), jnp.float32, 0.5, 1.5)
        return gamma, beta, mean, var

    s1, b1 = fold_bn(*bn_params(keys[4], Cmid))
    s2, b2 = fold_bn(*bn_params(keys[5], Cmid))
    s3, b3 = fold_bn(*bn_params(keys[6], Cout))

    # tile_rows=8 -> two spatial tiles per image (128 output lanes each), which
    # exercises the halo'd, double-buffered DMA path at the toy size.
    out = bottleneck_forward(x, w1, s1, b1, w2, s2, b2, w3, s3, b3, tile_rows=8)
    out = jax.block_until_ready(out)
    assert out.shape == (N, Cout, H, W)

    ref = reference_forward(x, w1, s1, b1, w2, s2, b2, w3, s3, b3)
    out_f32 = out.astype(jnp.float32)
    # bf16 activations + bf16 MXU operands (f32 accumulation) -> bf16 tolerance.
    assert jnp.allclose(out_f32, ref, atol=7.5e-2, rtol=5e-2), (
        "Pallas output mismatch vs reference, max err "
        f"{float(jnp.max(jnp.abs(out_f32 - ref)))}")

    print("KERNEL_OK")
</pallas_src>

<mosaic_0001>
module attributes {stable_mosaic.version = 11 : i64} {
  func.func @kernel(%arg0: i32, %arg1: i32, %arg2: memref<2x16x384xbf16, #tpu.memory_space<any>>, %arg3: memref<1x9x256xbf16, #tpu.memory_space<vmem>>, %arg4: memref<16x16xbf16, #tpu.memory_space<vmem>>, %arg5: memref<16x1xf32, #tpu.memory_space<vmem>>, %arg6: memref<16x144xbf16, #tpu.memory_space<vmem>>, %arg7: memref<16x1xf32, #tpu.memory_space<vmem>>, %arg8: memref<16x16xbf16, #tpu.memory_space<vmem>>, %arg9: memref<16x1xf32, #tpu.memory_space<vmem>>, %arg10: memref<1x16x128xbf16, #tpu.memory_space<vmem>>, %arg11: memref<2x16x256xbf16, #tpu.memory_space<vmem>>, %arg12: memref<144x256xbf16, #tpu.memory_space<vmem>>, %arg13: memref<2x!tpu.dma_semaphore, #tpu.memory_space<semaphore_mem>>) attributes {dimension_semantics = [#tpu.dimension_semantics<parallel>, #tpu.dimension_semantics<arbitrary>], iteration_bounds = array<i64: 2, 2>, scalar_prefetch = 0 : i64, scratch_operands = 3 : i64, tpu.core_type = #tpu.core_type<tc>, window_params = [{}, {transform_indices = @transform_1, window_bounds = array<i64: 1, 9, 256>}, {pipeline_mode = #tpu.pipeline_mode<synchronous>, transform_indices = @transform_2, window_bounds = array<i64: 16, 16>}, {pipeline_mode = #tpu.pipeline_mode<synchronous>, transform_indices = @transform_3, window_bounds = array<i64: 16, 1>}, {pipeline_mode = #tpu.pipeline_mode<synchronous>, transform_indices = @transform_4, window_bounds = array<i64: 16, 144>}, {pipeline_mode = #tpu.pipeline_mode<synchronous>, transform_indices = @transform_5, window_bounds = array<i64: 16, 1>}, {pipeline_mode = #tpu.pipeline_mode<synchronous>, transform_indices = @transform_6, window_bounds = array<i64: 16, 16>}, {pipeline_mode = #tpu.pipeline_mode<synchronous>, transform_indices = @transform_7, window_bounds = array<i64: 16, 1>}, {transform_indices = @transform_8, window_bounds = array<i64: 1, 16, 128>}]} {
    %c2_i32 = arith.constant 2 : i32
    %c0_i32 = arith.constant 0 : i32
    %0 = arith.cmpi eq, %c2_i32, %c0_i32 : i32
    %c1_i32 = arith.constant 1 : i32
    %1 = arith.select %0, %c1_i32, %c2_i32 : i32
    %2 = arith.remsi %arg1, %1 : i32
    %c0_i32_0 = arith.constant 0 : i32
    %3 = arith.cmpi ne, %2, %c0_i32_0 : i32
    %c0_i32_1 = arith.constant 0 : i32
    %4 = arith.cmpi slt, %2, %c0_i32_1 : i32
    %c0_i32_2 = arith.constant 0 : i32
    %5 = arith.cmpi slt, %1, %c0_i32_2 : i32
    %6 = arith.xori %4, %5 : i1
    %7 = arith.andi %6, %3 : i1
    %8 = arith.addi %2, %1 : i32
    %9 = arith.select %7, %8, %2 : i32
    %c0_i32_3 = arith.constant 0 : i32
    %10 = arith.cmpi eq, %arg1, %c0_i32_3 : i32
    %11 = arith.extui %10 : i1 to i32
    %c0_i32_4 = arith.constant 0 : i32
    %12 = arith.cmpi ne, %11, %c0_i32_4 : i32
    scf.if %12 {
      %c0_i32_50 = arith.constant 0 : i32
      %117 = tpu.assume_multiple %c0_i32_50, 128 : i32
      %c0_i32_51 = arith.constant 0 : i32
      %c0_i32_52 = arith.constant 0 : i32
      %c0_i32_53 = arith.constant 0 : i32
      %118 = tpu.memref_slice %arg2[%arg0, %c0_i32_53, %117] : memref<2x16x384xbf16, #tpu.memory_space<any>> -> memref<1x16x256xbf16, #tpu.memory_space<any>>
      %119 = tpu.memref_squeeze %118 : memref<1x16x256xbf16, #tpu.memory_space<any>> -> memref<16x256xbf16, #tpu.memory_space<any>>
      %c0_i32_54 = arith.constant 0 : i32
      %c0_i32_55 = arith.constant 0 : i32
      %120 = tpu.memref_slice %arg11[%c0_i32_51, %c0_i32_54, %c0_i32_55] : memref<2x16x256xbf16, #tpu.memory_space<vmem>> -> memref<1x16x256xbf16, #tpu.memory_space<vmem>>
      %121 = tpu.memref_squeeze %120 : memref<1x16x256xbf16, #tpu.memory_space<vmem>> -> memref<16x256xbf16, #tpu.memory_space<vmem>>
      %122 = tpu.memref_slice %arg13[%c0_i32_52] : memref<2x!tpu.dma_semaphore, #tpu.memory_space<semaphore_mem>> -> memref<1x!tpu.dma_semaphore, #tpu.memory_space<semaphore_mem>>
      %123 = tpu.memref_squeeze %122 : memref<1x!tpu.dma_semaphore, #tpu.memory_space<semaphore_mem>> -> memref<!tpu.dma_semaphore, #tpu.memory_space<semaphore_mem>>
      tpu.enqueue_dma source(%119 : memref<16x256xbf16, #tpu.memory_space<any>>) target(%121 : memref<16x256xbf16, #tpu.memory_space<vmem>>) target_semaphore(%123 : memref<!tpu.dma_semaphore, #tpu.memory_space<semaphore_mem>>)
    } else {
    }
    %c1_i32_5 = arith.constant 1 : i32
    %13 = arith.addi %arg1, %c1_i32_5 : i32
    %c2_i32_6 = arith.constant 2 : i32
    %14 = arith.cmpi slt, %13, %c2_i32_6 : i32
    %15 = arith.extui %14 : i1 to i32
    %c0_i32_7 = arith.constant 0 : i32
    %16 = arith.cmpi ne, %15, %c0_i32_7 : i32
    scf.if %16 {
      %c1_i32_50 = arith.constant 1 : i32
      %117 = arith.addi %arg1, %c1_i32_50 : i32
      %c1_i32_51 = arith.constant 1 : i32
      %118 = arith.subi %c1_i32_51, %9 : i32
      %c128_i32 = arith.constant 128 : i32
      %119 = arith.muli %117, %c128_i32 : i32
      %120 = tpu.assume_multiple %119, 128 : i32
      %c0_i32_52 = arith.constant 0 : i32
      %121 = tpu.memref_slice %arg2[%arg0, %c0_i32_52, %120] : memref<2x16x384xbf16, #tpu.memory_space<any>> -> memref<1x16x256xbf16, #tpu.memory_space<any>>
      %122 = tpu.memref_squeeze %121 : memref<1x16x256xbf16, #tpu.memory_space<any>> -> memref<16x256xbf16, #tpu.memory_space<any>>
      %c0_i32_53 = arith.constant 0 : i32
      %c0_i32_54 = arith.constant 0 : i32
      %123 = tpu.memref_slice %arg11[%118, %c0_i32_53, %c0_i32_54] : memref<2x16x256xbf16, #tpu.memory_space<vmem>> -> memref<1x16x256xbf16, #tpu.memory_space<vmem>>
      %124 = tpu.memref_squeeze %123 : memref<1x16x256xbf16, #tpu.memory_space<vmem>> -> memref<16x256xbf16, #tpu.memory_space<vmem>>
      %125 = tpu.memref_slice %arg13[%118] : memref<2x!tpu.dma_semaphore, #tpu.memory_space<semaphore_mem>> -> memref<1x!tpu.dma_semaphore, #tpu.memory_space<semaphore_mem>>
      %126 = tpu.memref_squeeze %125 : memref<1x!tpu.dma_semaphore, #tpu.memory_space<semaphore_mem>> -> memref<!tpu.dma_semaphore, #tpu.memory_space<semaphore_mem>>
      tpu.enqueue_dma source(%122 : memref<16x256xbf16, #tpu.memory_space<any>>) target(%124 : memref<16x256xbf16, #tpu.memory_space<vmem>>) target_semaphore(%126 : memref<!tpu.dma_semaphore, #tpu.memory_space<semaphore_mem>>)
    } else {
    }
    %c0_i32_8 = arith.constant 0 : i32
    %c0_i32_9 = arith.constant 0 : i32
    %17 = tpu.memref_slice %arg2[%arg0, %c0_i32_8, %c0_i32_9] : memref<2x16x384xbf16, #tpu.memory_space<any>> -> memref<1x16x256xbf16, #tpu.memory_space<any>>
    %18 = tpu.memref_squeeze %17 : memref<1x16x256xbf16, #tpu.memory_space<any>> -> memref<16x256xbf16, #tpu.memory_space<any>>
    %c0_i32_10 = arith.constant 0 : i32
    %c0_i32_11 = arith.constant 0 : i32
    %19 = tpu.memref_slice %arg11[%9, %c0_i32_10, %c0_i32_11] : memref<2x16x256xbf16, #tpu.memory_space<vmem>> -> memref<1x16x256xbf16, #tpu.memory_space<vmem>>
    %20 = tpu.memref_squeeze %19 : memref<1x16x256xbf16, #tpu.memory_space<vmem>> -> memref<16x256xbf16, #tpu.memory_space<vmem>>
    %21 = tpu.memref_slice %arg13[%9] : memref<2x!tpu.dma_semaphore, #tpu.memory_space<semaphore_mem>> -> memref<1x!tpu.dma_semaphore, #tpu.memory_space<semaphore_mem>>
    %22 = tpu.memref_squeeze %21 : memref<1x!tpu.dma_semaphore, #tpu.memory_space<semaphore_mem>> -> memref<!tpu.dma_semaphore, #tpu.memory_space<semaphore_mem>>
    tpu.wait_dma2 semaphore(%22 : memref<!tpu.dma_semaphore, #tpu.memory_space<semaphore_mem>>) src(%18 : memref<16x256xbf16, #tpu.memory_space<any>>) dst(%20 : memref<16x256xbf16, #tpu.memory_space<vmem>>)
    %23 = arith.index_cast %9 : i32 to index
    %c0 = arith.constant 0 : index
    %c0_12 = arith.constant 0 : index
    %24 = vector.load %arg11[%23, %c0, %c0_12] : memref<2x16x256xbf16, #tpu.memory_space<vmem>>, vector<1x16x256xbf16>
    %25 = vector.shape_cast %24 : vector<1x16x256xbf16> to vector<16x256xbf16>
    %c0_13 = arith.constant 0 : index
    %c0_14 = arith.constant 0 : index
    %c0_15 = arith.constant 0 : index
    %26 = vector.load %arg3[%c0_13, %c0_14, %c0_15] : memref<1x9x256xbf16, #tpu.memory_space<vmem>>, vector<1x9x256xbf16>
    %27 = vector.shape_cast %26 : vector<1x9x256xbf16> to vector<9x256xbf16>
    %c0_16 = arith.constant 0 : index
    %c0_17 = arith.constant 0 : index
    %28 = vector.load %arg4[%c0_16, %c0_17] : memref<16x16xbf16, #tpu.memory_space<vmem>>, vector<16x16xbf16>
    %cst = arith.constant dense<0.000000e+00> : vector<16x256xf32>
    %29 = tpu.matmul %28, %25, %cst {dimension_numbers = #tpu.dot_dimension_numbers<[1], [0], [0], [1], [0, 0, 1, 1], [], []>} : vector<16x16xbf16>, vector<16x256xbf16>, vector<16x256xf32> -> vector<16x256xf32>
    %c0_18 = arith.constant 0 : index
    %c0_19 = arith.constant 0 : index
    %30 = vector.load %arg5[%c0_18, %c0_19] : memref<16x1xf32, #tpu.memory_space<vmem>>, vector<16x1xf32>
    %31 = vector.broadcast %30 : vector<16x1xf32> to vector<16x256xf32>
    %32 = arith.addf %29, %31 : vector<16x256xf32>
    %cst_20 = arith.constant 0.000000e+00 : f32
    %33 = vector.broadcast %cst_20 : f32 to vector<16x256xf32>
    %34 = arith.maximumf %32, %33 : vector<16x256xf32>
    %c17_i32 = arith.constant 17 : i32
    %35 = tpu.dynamic_rotate %34 by %c17_i32 dim 1 : vector<16x256xf32>, i32 -> vector<16x256xf32>
    %36 = vector.extract_strided_slice %27 {offsets = [0, 0], sizes = [1, 256], strides = [1, 1]} : vector<9x256xbf16> to vector<1x256xbf16>
    %37 = arith.extf %36 : vector<1x256xbf16> to vector<1x256xf32>
    %38 = vector.broadcast %37 : vector<1x256xf32> to vector<16x256xf32>
    %39 = arith.mulf %35, %38 : vector<16x256xf32>
    %40 = arith.truncf %39 : vector<16x256xf32> to vector<16x256xbf16>
    %c0_21 = arith.constant 0 : index
    %c0_22 = arith.constant 0 : index
    %41 = vector.load %arg12[%c0_21, %c0_22] : memref<144x256xbf16, #tpu.memory_space<vmem>>, vector<16x256xbf16>
    tpu.vector_store %arg12[%c0_21, %c0_22], %40 {strides = array<i32>} : memref<144x256xbf16, #tpu.memory_space<vmem>>, vector<16x256xbf16>,
    %c16_i32 = arith.constant 16 : i32
    %42 = tpu.dynamic_rotate %34 by %c16_i32 dim 1 : vector<16x256xf32>, i32 -> vector<16x256xf32>
    %43 = vector.extract_strided_slice %27 {offsets = [1, 0], sizes = [1, 256], strides = [1, 1]} : vector<9x256xbf16> to vector<1x256xbf16>
    %44 = arith.extf %43 : vector<1x256xbf16> to vector<1x256xf32>
    %45 = vector.broadcast %44 : vector<1x256xf32> to vector<16x256xf32>
    %46 = arith.mulf %42, %45 : vector<16x256xf32>
    %47 = arith.truncf %46 : vector<16x256xf32> to vector<16x256xbf16>
    %c16 = arith.constant 16 : index
    %c0_23 = arith.constant 0 : index
    %48 = vector.load %arg12[%c16, %c0_23] : memref<144x256xbf16, #tpu.memory_space<vmem>>, vector<16x256xbf16>
    tpu.vector_store %arg12[%c16, %c0_23], %47 {strides = array<i32>} : memref<144x256xbf16, #tpu.memory_space<vmem>>, vector<16x256xbf16>,
    %c15_i32 = arith.constant 15 : i32
    %49 = tpu.dynamic_rotate %34 by %c15_i32 dim 1 : vector<16x256xf32>, i32 -> vector<16x256xf32>
    %50 = vector.extract_strided_slice %27 {offsets = [2, 0], sizes = [1, 256], strides = [1, 1]} : vector<9x256xbf16> to vector<1x256xbf16>
    %51 = arith.extf %50 : vector<1x256xbf16> to vector<1x256xf32>
    %52 = vector.broadcast %51 : vector<1x256xf32> to vector<16x256xf32>
    %53 = arith.mulf %49, %52 : vector<16x256xf32>
    %54 = arith.truncf %53 : vector<16x256xf32> to vector<16x256xbf16>
    %c32 = arith.constant 32 : index
    %c0_24 = arith.constant 0 : index
    %55 = vector.load %arg12[%c32, %c0_24] : memref<144x256xbf16, #tpu.memory_space<vmem>>, vector<16x256xbf16>
    tpu.vector_store %arg12[%c32, %c0_24], %54 {strides = array<i32>} : memref<144x256xbf16, #tpu.memory_space<vmem>>, vector<16x256xbf16>,
    %c1_i32_25 = arith.constant 1 : i32
    %56 = tpu.dynamic_rotate %34 by %c1_i32_25 dim 1 : vector<16x256xf32>, i32 -> vector<16x256xf32>
    %57 = vector.extract_strided_slice %27 {offsets = [3, 0], sizes = [1, 256], strides = [1, 1]} : vector<9x256xbf16> to vector<1x256xbf16>
    %58 = arith.extf %57 : vector<1x256xbf16> to vector<1x256xf32>
    %59 = vector.broadcast %58 : vector<1x256xf32> to vector<16x256xf32>
    %60 = arith.mulf %56, %59 : vector<16x256xf32>
    %61 = arith.truncf %60 : vector<16x256xf32> to vector<16x256xbf16>
    %c48 = arith.constant 48 : index
    %c0_26 = arith.constant 0 : index
    %62 = vector.load %arg12[%c48, %c0_26] : memref<144x256xbf16, #tpu.memory_space<vmem>>, vector<16x256xbf16>
    tpu.vector_store %arg12[%c48, %c0_26], %61 {strides = array<i32>} : memref<144x256xbf16, #tpu.memory_space<vmem>>, vector<16x256xbf16>,
    %63 = arith.truncf %34 : vector<16x256xf32> to vector<16x256xbf16>
    %c64 = arith.constant 64 : index
    %c0_27 = arith.constant 0 : index
    %64 = vector.load %arg12[%c64, %c0_27] : memref<144x256xbf16, #tpu.memory_space<vmem>>, vector<16x256xbf16>
    tpu.vector_store %arg12[%c64, %c0_27], %63 {strides = array<i32>} : memref<144x256xbf16, #tpu.memory_space<vmem>>, vector<16x256xbf16>,
    %c255_i32 = arith.constant 255 : i32
    %65 = tpu.dynamic_rotate %34 by %c255_i32 dim 1 : vector<16x256xf32>, i32 -> vector<16x256xf32>
    %66 = vector.extract_strided_slice %27 {offsets = [5, 0], sizes = [1, 256], strides = [1, 1]} : vector<9x256xbf16> to vector<1x256xbf16>
    %67 = arith.extf %66 : vector<1x256xbf16> to vector<1x256xf32>
    %68 = vector.broadcast %67 : vector<1x256xf32> to vector<16x256xf32>
    %69 = arith.mulf %65, %68 : vector<16x256xf32>
    %70 = arith.truncf %69 : vector<16x256xf32> to vector<16x256xbf16>
    %c80 = arith.constant 80 : index
    %c0_28 = arith.constant 0 : index
    %71 = vector.load %arg12[%c80, %c0_28] : memref<144x256xbf16, #tpu.memory_space<vmem>>, vector<16x256xbf16>
    tpu.vector_store %arg12[%c80, %c0_28], %70 {strides = array<i32>} : memref<144x256xbf16, #tpu.memory_space<vmem>>, vector<16x256xbf16>,
    %c241_i32 = arith.constant 241 : i32
    %72 = tpu.dynamic_rotate %34 by %c241_i32 dim 1 : vector<16x256xf32>, i32 -> vector<16x256xf32>
    %73 = vector.extract_strided_slice %27 {offsets = [6, 0], sizes = [1, 256], strides = [1, 1]} : vector<9x256xbf16> to vector<1x256xbf16>
    %74 = arith.extf %73 : vector<1x256xbf16> to vector<1x256xf32>
    %75 = vector.broadcast %74 : vector<1x256xf32> to vector<16x256xf32>
    %76 = arith.mulf %72, %75 : vector<16x256xf32>
    %77 = arith.truncf %76 : vector<16x256xf32> to vector<16x256xbf16>
    %c96 = arith.constant 96 : index
    %c0_29 = arith.constant 0 : index
    %78 = vector.load %arg12[%c96, %c0_29] : memref<144x256xbf16, #tpu.memory_space<vmem>>, vector<16x256xbf16>
    tpu.vector_store %arg12[%c96, %c0_29], %77 {strides = array<i32>} : memref<144x256xbf16, #tpu.memory_space<vmem>>, vector<16x256xbf16>,
    %c240_i32 = arith.constant 240 : i32
    %79 = tpu.dynamic_rotate %34 by %c240_i32 dim 1 : vector<16x256xf32>, i32 -> vector<16x256xf32>
    %80 = vector.extract_strided_slice %27 {offsets = [7, 0], sizes = [1, 256], strides = [1, 1]} : vector<9x256xbf16> to vector<1x256xbf16>
    %81 = arith.extf %80 : vector<1x256xbf16> to vector<1x256xf32>
    %82 = vector.broadcast %81 : vector<1x256xf32> to vector<16x256xf32>
    %83 = arith.mulf %79, %82 : vector<16x256xf32>
    %84 = arith.truncf %83 : vector<16x256xf32> to vector<16x256xbf16>
    %c112 = arith.constant 112 : index
    %c0_30 = arith.constant 0 : index
    %85 = vector.load %arg12[%c112, %c0_30] : memref<144x256xbf16, #tpu.memory_space<vmem>>, vector<16x256xbf16>
    tpu.vector_store %arg12[%c112, %c0_30], %84 {strides = array<i32>} : memref<144x256xbf16, #tpu.memory_space<vmem>>, vector<16x256xbf16>,
    %c239_i32 = arith.constant 239 : i32
    %86 = tpu.dynamic_rotate %34 by %c239_i32 dim 1 : vector<16x256xf32>, i32 -> vector<16x256xf32>
    %87 = vector.extract_strided_slice %27 {offsets = [8, 0], sizes = [1, 256], strides = [1, 1]} : vector<9x256xbf16> to vector<1x256xbf16>
    %88 = arith.extf %87 : vector<1x256xbf16> to vector<1x256xf32>
    %89 = vector.broadcast %88 : vector<1x256xf32> to vector<16x256xf32>
    %90 = arith.mulf %86, %89 : vector<16x256xf32>
    %91 = arith.truncf %90 : vector<16x256xf32> to vector<16x256xbf16>
    %c128 = arith.constant 128 : index
    %c0_31 = arith.constant 0 : index
    %92 = vector.load %arg12[%c128, %c0_31] : memref<144x256xbf16, #tpu.memory_space<vmem>>, vector<16x256xbf16>
    tpu.vector_store %arg12[%c128, %c0_31], %91 {strides = array<i32>} : memref<144x256xbf16, #tpu.memory_space<vmem>>, vector<16x256xbf16>,
    %c0_32 = arith.constant 0 : index
    %c0_33 = arith.constant 0 : index
    %93 = vector.load %arg6[%c0_32, %c0_33] : memref<16x144xbf16, #tpu.memory_space<vmem>>, vector<16x144xbf16>
    %c0_34 = arith.constant 0 : index
    %c0_35 = arith.constant 0 : index
    %94 = vector.load %arg12[%c0_34, %c0_35] : memref<144x256xbf16, #tpu.memory_space<vmem>>, vector<144x256xbf16>
    %cst_36 = arith.constant dense<0.000000e+00> : vector<16x256xf32>
    %95 = tpu.matmul %93, %94, %cst_36 {dimension_numbers = #tpu.dot_dimension_numbers<[1], [0], [0], [1], [0, 0, 1, 1], [], []>} : vector<16x144xbf16>, vector<144x256xbf16>, vector<16x256xf32> -> vector<16x256xf32>
    %c0_37 = arith.constant 0 : index
    %c0_38 = arith.constant 0 : index
    %96 = vector.load %arg7[%c0_37, %c0_38] : memref<16x1xf32, #tpu.memory_space<vmem>>, vector<16x1xf32>
    %97 = vector.broadcast %96 : vector<16x1xf32> to vector<16x256xf32>
    %98 = arith.addf %95, %97 : vector<16x256xf32>
    %cst_39 = arith.constant 0.000000e+00 : f32
    %99 = vector.broadcast %cst_39 : f32 to vector<16x256xf32>
    %100 = arith.maximumf %98, %99 : vector<16x256xf32>
    %c0_40 = arith.constant 0 : index
    %c0_41 = arith.constant 0 : index
    %101 = vector.load %arg8[%c0_40, %c0_41] : memref<16x16xbf16, #tpu.memory_space<vmem>>, vector<16x16xbf16>
    %102 = arith.truncf %100 : vector<16x256xf32> to vector<16x256xbf16>
    %cst_42 = arith.constant dense<0.000000e+00> : vector<16x256xf32>
    %103 = tpu.matmul %101, %102, %cst_42 {dimension_numbers = #tpu.dot_dimension_numbers<[1], [0], [0], [1], [0, 0, 1, 1], [], []>} : vector<16x16xbf16>, vector<16x256xbf16>, vector<16x256xf32> -> vector<16x256xf32>
    %c0_43 = arith.constant 0 : index
    %c0_44 = arith.constant 0 : index
    %104 = vector.load %arg9[%c0_43, %c0_44] : memref<16x1xf32, #tpu.memory_space<vmem>>, vector<16x1xf32>
    %105 = vector.broadcast %104 : vector<16x1xf32> to vector<16x256xf32>
    %106 = arith.addf %103, %105 : vector<16x256xf32>
    %107 = arith.extf %25 : vector<16x256xbf16> to vector<16x256xf32>
    %108 = arith.addf %106, %107 : vector<16x256xf32>
    %cst_45 = arith.constant 0.000000e+00 : f32
    %109 = vector.broadcast %cst_45 : f32 to vector<16x256xf32>
    %110 = arith.maximumf %108, %109 : vector<16x256xf32>
    %c240_i32_46 = arith.constant 240 : i32
    %111 = tpu.dynamic_rotate %110 by %c240_i32_46 dim 1 : vector<16x256xf32>, i32 -> vector<16x256xf32>
    %112 = vector.extract_strided_slice %111 {offsets = [0, 0], sizes = [16, 128], strides = [1, 1]} : vector<16x256xf32> to vector<16x128xf32>
    %113 = arith.truncf %112 : vector<16x128xf32> to vector<16x128xbf16>
    %c0_47 = arith.constant 0 : index
    %c0_48 = arith.constant 0 : index
    %c0_49 = arith.constant 0 : index
    %114 = vector.load %arg10[%c0_47, %c0_48, %c0_49] : memref<1x16x128xbf16, #tpu.memory_space<vmem>>, vector<1x16x128xbf16>
    %115 = vector.shape_cast %114 : vector<1x16x128xbf16> to vector<16x128xbf16>
    %116 = vector.shape_cast %113 : vector<16x128xbf16> to vector<1x16x128xbf16>
    tpu.vector_store %arg10[%c0_47, %c0_48, %c0_49], %116 {strides = array<i32>} : memref<1x16x128xbf16, #tpu.memory_space<vmem>>, vector<1x16x128xbf16>,
    return
  }
  func.func @transform_1(%arg0: i32, %arg1: i32) -> (i32, i32, i32) {
    %c0_i32 = arith.constant 0 : i32
    %c0_i32_0 = arith.constant 0 : i32
    %c0_i32_1 = arith.constant 0 : i32
    return %arg1, %c0_i32, %c0_i32_0 : i32, i32, i32
  }
  func.func @transform_2(%arg0: i32, %arg1: i32) -> (i32, i32) {
    %c0_i32 = arith.constant 0 : i32
    %c0_i32_0 = arith.constant 0 : i32
    %c0_i32_1 = arith.constant 0 : i32
    return %c0_i32, %c0_i32_0 : i32, i32
  }
  func.func @transform_3(%arg0: i32, %arg1: i32) -> (i32, i32) {
    %c0_i32 = arith.constant 0 : i32
    %c0_i32_0 = arith.constant 0 : i32
    %c0_i32_1 = arith.constant 0 : i32
    return %c0_i32, %c0_i32_0 : i32, i32
  }
  func.func @transform_4(%arg0: i32, %arg1: i32) -> (i32, i32) {
    %c0_i32 = arith.constant 0 : i32
    %c0_i32_0 = arith.constant 0 : i32
    %c0_i32_1 = arith.constant 0 : i32
    return %c0_i32, %c0_i32_0 : i32, i32
  }
  func.func @transform_5(%arg0: i32, %arg1: i32) -> (i32, i32) {
    %c0_i32 = arith.constant 0 : i32
    %c0_i32_0 = arith.constant 0 : i32
    %c0_i32_1 = arith.constant 0 : i32
    return %c0_i32, %c0_i32_0 : i32, i32
  }
  func.func @transform_6(%arg0: i32, %arg1: i32) -> (i32, i32) {
    %c0_i32 = arith.constant 0 : i32
    %c0_i32_0 = arith.constant 0 : i32
    %c0_i32_1 = arith.constant 0 : i32
    return %c0_i32, %c0_i32_0 : i32, i32
  }
  func.func @transform_7(%arg0: i32, %arg1: i32) -> (i32, i32) {
    %c0_i32 = arith.constant 0 : i32
    %c0_i32_0 = arith.constant 0 : i32
    %c0_i32_1 = arith.constant 0 : i32
    return %c0_i32, %c0_i32_0 : i32, i32
  }
  func.func @transform_8(%arg0: i32, %arg1: i32) -> (i32, i32, i32) {
    %c0_i32 = arith.constant 0 : i32
    %c0_i32_0 = arith.constant 0 : i32
    return %arg0, %c0_i32, %arg1 : i32, i32, i32
  }
}

</mosaic_0001>

<llo_original>
// kernel: tpu_custom_call.1
$region0: #{tpu_custom_call.1}
  #allocation0 [shape = 'u32[]', space=smem, size = 0x4, offset = 0x4, fixed_abs, tag = 'smem constant byte address 0x4 - core index']
  #allocation1 [shape = 'u32[144,128]{1,0:T(1,128)}', space=vmem, size = 0x12000, scoped, tag = 'internal scratch']
  #allocation2 [shape = 'bf16[2,16,256]{2,1,0:T(16,128)(2,1)}', space=vmem, size = 0x4000, scoped, tag = 'scratch operand']
  #allocation3 [shape = 'bf16[144,256]{1,0:T(16,128)(2,1)}', space=vmem, size = 0x12000, scoped, tag = 'scratch operand']
  #allocation4 [shape = 's32[2]{0}', space=sflag, size = 0x8, scoped, tag = 'scratch operand']
  #allocation18 [shape = 's32[]', space=sflag, size = 0x4, offset = 0, fixed_abs, tag = 'sflag constant byte address 0x0 - dummy sync flag']
  #allocation20 [shape = 's32[]', space=sflag, size = 0x4, offset = 0, fixed_abs, tag = 'sflag constant byte address 0x0 - dummy sync flag']
  %s0 = inlined_call_operand.hbm [shape: bf16[2,16,384], index: 0, kind: input, shape index: {}]
  %s1 = inlined_call_operand.hbm [shape: bf16[2,9,256], index: 1, kind: input, shape index: {}]
  %s2 = inlined_call_operand.hbm [shape: bf16[16,16], index: 2, kind: input, shape index: {}]
  %s3 = inlined_call_operand.hbm [shape: f32[16,1], index: 3, kind: input, shape index: {}]
  %s4 = inlined_call_operand.hbm [shape: bf16[16,144], index: 4, kind: input, shape index: {}]
  %s5 = inlined_call_operand.hbm [shape: f32[16,1], index: 5, kind: input, shape index: {}]
  %s6 = inlined_call_operand.hbm [shape: bf16[16,16], index: 6, kind: input, shape index: {}]
  %s7 = inlined_call_operand.hbm [shape: f32[16,1], index: 7, kind: input, shape index: {}]
  %s8 = inlined_call_operand.hbm [shape: bf16[2,16,256], index: 8, kind: output, shape index: {}]
  %s9 = sld [smem:[#allocation0]]
  $region97: #{tpu_custom_call.1} parent=0
    _
  %s11 = ssub.s32 1, %s9
  %s12 = scalar_select 0, %s11, %s9
  $region1: #{tpu_custom_call.1} parent=0
    #allocation5 [shape = 'u8[16384]{0}', space=vmem, size = 0x4000, scoped, tag = 'input window, operand 1']
    #allocation6 [shape = 's32[2]{0}', space=sflag, size = 0x8, scoped, tag = 'scoped memory for tpu_custom_call.1']
    #allocation7 [shape = 's32[2]{0}', space=sflag, size = 0x8, scoped, tag = 'scoped memory for tpu_custom_call.1']
    #allocation8 [shape = 'u8[4096]{0}', space=vmem, size = 0x1000, scoped, tag = 'input window, operand 2, single buffered']
    #allocation9 [shape = 's32[1]{0}', space=sflag, size = 0x4, scoped, tag = 'scoped memory for tpu_custom_call.1']
    #allocation10 [shape = 'u8[8192]{0}', space=vmem, size = 0x2000, scoped, tag = 'input window, operand 3, single buffered']
    #allocation11 [shape = 'u8[8192]{0}', space=vmem, size = 0x2000, scoped, tag = 'input window, operand 4, single buffered']
    #allocation12 [shape = 's32[1]{0}', space=sflag, size = 0x4, scoped, tag = 'scoped memory for tpu_custom_call.1']
    #allocation13 [shape = 'u8[8192]{0}', space=vmem, size = 0x2000, scoped, tag = 'input window, operand 5, single buffered']
    #allocation14 [shape = 'u8[4096]{0}', space=vmem, size = 0x1000, scoped, tag = 'input window, operand 6, single buffered']
    #allocation15 [shape = 's32[1]{0}', space=sflag, size = 0x4, scoped, tag = 'scoped memory for tpu_custom_call.1']
    #allocation16 [shape = 'u8[8192]{0}', space=vmem, size = 0x2000, scoped, tag = 'input window, operand 7, single buffered']
    #allocation17 [shape = 'u8[8192]{0}', space=vmem, size = 0x2000, scoped, tag = 'output window, operand 0']
    %13 = vsyncpa [#allocation6], 0
    %s14 = scalar_lea.sflag [#allocation6], 1
    %15 = vsyncpa %s14, 0
    %16 = vsyncpa [#allocation9], 0
    %17 = vsyncpa [#allocation12], 0
    %18 = vsyncpa [#allocation15], 0
    %19 = vsyncpa [#allocation7], 0
    %s20 = scalar_lea.sflag [#allocation7], 1
    %21 = vsyncpa %s20, 0
    loop: start=0, step=1, limit=6
    $region2: #{tpu_custom_call.1} parent=1 // loop_pre_header
      _
    $region3: #{tpu_custom_call.1} parent=1 // loop_header
      %s23 = sphi 0, %s27
      %p24 = scmp.ge.s32.totalorder %s23, 6
      %s30 = sphi 0, %s42
      %s31 = sphi 0, %s38
      %s32 = sphi 0, %s30
      %s33 = sphi 0, %s31
      %s34 = sphi 0, %s32
      %s35 = sphi 0, %s33
      %s45 = sphi 0, %s47
      %s48 = sphi 0, %s45
      %s49 = sphi 0, %s48
      %s65 = sphi 0, %s49
      %s69 = sphi 0, %s69
      %s71 = sphi 0, %s69
      %s72 = sphi 0, %s71
      %s86 = sphi 0, %s72
      %s90 = sphi 0, %s90
      %s92 = sphi 0, %s90
      %s93 = sphi 0, %s92
      %s107 = sphi 0, %s93
      %s111 = sphi 0, %s111
      %s113 = sphi 0, %s111
      %s114 = sphi 0, %s113
      %s128 = sphi 0, %s114
      %s132 = sphi 0, %s132
      %s134 = sphi 0, %s132
      %s135 = sphi 0, %s134
      %s149 = sphi 0, %s135
      %s153 = sphi 0, %s153
      %s155 = sphi 0, %s153
      %s156 = sphi 0, %s155
      %s170 = sphi 0, %s156
      %s174 = sphi 0, %s174
      %s176 = sphi 0, %s174
      %s177 = sphi 0, %s176
      %s191 = sphi 0, %s177
      %s199 = sphi 0, %s201
      %s202 = sphi 0, %s199
      %s203 = sphi 0, %s202
      %s219 = sphi 0, %s203
    $region4: #{tpu_custom_call.1} parent=1 // loop_header_branch
      %26 = sbr.rel (%p24) target = $region8
    $region5: #{tpu_custom_call.1} parent=1 // loop_body
      %s28 = ssub.s32 %s23, 1
      %s29 = ssub.s32 %s23, 2
      %s36 = sadd.s32 1, %s31
      %p37 = scmp.ge.s32.totalorder %s36, 2
      %s38 = scalar_select %p37, 0, %s36
      %s39 = sadd.s32 1, %s30
      %s40 = scalar_select %p37, %s39, %s30
      %p41 = scmp.ge.s32.totalorder %s40, 2
      %s42 = scalar_select %p41, 0, %s40
      %s43 = ssub.s32 %s31, %s38
      %p44 = scmp.eq.s32.totalorder %s43, 0
      %s46 = sadd.s32 %s45, 1
      %s47 = scalar_select %p44, %s45, %s46
      %p50 = pneg %p44
      %p51 = scmp.eq.s32.totalorder %s23, 3
      %p52 = por %p50, %p51
      %p53 = scmp.ne.s32.totalorder %s45, %s48
      %p54 = scmp.eq.s32.totalorder %s23, 0
      %p55 = por %p53, %p54
      %p56 = scmp.ne.s32.totalorder %s45, %s48
      %p57 = scmp.eq.s32.totalorder %s28, 3
      %p58 = por %p56, %p57
      %p59 = scmp.ne.s32.totalorder %s48, %s49
      %p60 = scmp.eq.s32.totalorder %s28, 0
      %p61 = por %p59, %p60
      %p62 = scmp.ne.s32.totalorder %s48, %s49
      %p63 = scmp.eq.s32.totalorder %s29, 3
      %p64 = por %p62, %p63
      %p66 = scmp.ne.s32.totalorder %s49, %s65
      %p67 = scmp.eq.s32.totalorder %s29, 0
      %p68 = por %p66, %p67
      %s70 = sadd.s32 %s69, 1
      %p73 = scmp.eq.s32.totalorder %s23, 3
      %p74 = scmp.ne.s32.totalorder %s69, %s71
      %p75 = scmp.eq.s32.totalorder %s23, 0
      %p76 = por %p74, %p75
      %p77 = scmp.ne.s32.totalorder %s69, %s71
      %p78 = scmp.eq.s32.totalorder %s28, 3
      %p79 = por %p77, %p78
      %p80 = scmp.ne.s32.totalorder %s71, %s72
      %p81 = scmp.eq.s32.totalorder %s28, 0
      %p82 = por %p80, %p81
      %p83 = scmp.ne.s32.totalorder %s71, %s72
      %p84 = scmp.eq.s32.totalorder %s29, 3
      %p85 = por %p83, %p84
      %p87 = scmp.ne.s32.totalorder %s72, %s86
      %p88 = scmp.eq.s32.totalorder %s29, 0
      %p89 = por %p87, %p88
      %s91 = sadd.s32 %s90, 1
      %p94 = scmp.eq.s32.totalorder %s23, 3
      %p95 = scmp.ne.s32.totalorder %s90, %s92
      %p96 = scmp.eq.s32.totalorder %s23, 0
      %p97 = por %p95, %p96
      %p98 = scmp.ne.s32.totalorder %s90, %s92
      %p99 = scmp.eq.s32.totalorder %s28, 3
      %p100 = por %p98, %p99
      %p101 = scmp.ne.s32.totalorder %s92, %s93
      %p102 = scmp.eq.s32.totalorder %s28, 0
      %p103 = por %p101, %p102
      %p104 = scmp.ne.s32.totalorder %s92, %s93
      %p105 = scmp.eq.s32.totalorder %s29, 3
      %p106 = por %p104, %p105
      %p108 = scmp.ne.s32.totalorder %s93, %s107
      %p109 = scmp.eq.s32.totalorder %s29, 0
      %p110 = por %p108, %p109
      %s112 = sadd.s32 %s111, 1
      %p115 = scmp.eq.s32.totalorder %s23, 3
      %p116 = scmp.ne.s32.totalorder %s111, %s113
      %p117 = scmp.eq.s32.totalorder %s23, 0
      %p118 = por %p116, %p117
      %p119 = scmp.ne.s32.totalorder %s111, %s113
      %p120 = scmp.eq.s32.totalorder %s28, 3
      %p121 = por %p119, %p120
      %p122 = scmp.ne.s32.totalorder %s113, %s114
      %p123 = scmp.eq.s32.totalorder %s28, 0
      %p124 = por %p122, %p123
      %p125 = scmp.ne.s32.totalorder %s113, %s114
      %p126 = scmp.eq.s32.totalorder %s29, 3
      %p127 = por %p125, %p126
      %p129 = scmp.ne.s32.totalorder %s114, %s128
      %p130 = scmp.eq.s32.totalorder %s29, 0
      %p131 = por %p129, %p130
      %s133 = sadd.s32 %s132, 1
      %p136 = scmp.eq.s32.totalorder %s23, 3
      %p137 = scmp.ne.s32.totalorder %s132, %s134
      %p138 = scmp.eq.s32.totalorder %s23, 0
      %p139 = por %p137, %p138
      %p140 = scmp.ne.s32.totalorder %s132, %s134
      %p141 = scmp.eq.s32.totalorder %s28, 3
      %p142 = por %p140, %p141
      %p143 = scmp.ne.s32.totalorder %s134, %s135
      %p144 = scmp.eq.s32.totalorder %s28, 0
      %p145 = por %p143, %p144
      %p146 = scmp.ne.s32.totalorder %s134, %s135
      %p147 = scmp.eq.s32.totalorder %s29, 3
      %p148 = por %p146, %p147
      %p150 = scmp.ne.s32.totalorder %s135, %s149
      %p151 = scmp.eq.s32.totalorder %s29, 0
      %p152 = por %p150, %p151
      %s154 = sadd.s32 %s153, 1
      %p157 = scmp.eq.s32.totalorder %s23, 3
      %p158 = scmp.ne.s32.totalorder %s153, %s155
      %p159 = scmp.eq.s32.totalorder %s23, 0
      %p160 = por %p158, %p159
      %p161 = scmp.ne.s32.totalorder %s153, %s155
      %p162 = scmp.eq.s32.totalorder %s28, 3
      %p163 = por %p161, %p162
      %p164 = scmp.ne.s32.totalorder %s155, %s156
      %p165 = scmp.eq.s32.totalorder %s28, 0
      %p166 = por %p164, %p165
      %p167 = scmp.ne.s32.totalorder %s155, %s156
      %p168 = scmp.eq.s32.totalorder %s29, 3
      %p169 = por %p167, %p168
      %p171 = scmp.ne.s32.totalorder %s156, %s170
      %p172 = scmp.eq.s32.totalorder %s29, 0
      %p173 = por %p171, %p172
      %s175 = sadd.s32 %s174, 1
      %p178 = scmp.eq.s32.totalorder %s23, 3
      %p179 = scmp.ne.s32.totalorder %s174, %s176
      %p180 = scmp.eq.s32.totalorder %s23, 0
      %p181 = por %p179, %p180
      %p182 = scmp.ne.s32.totalorder %s174, %s176
      %p183 = scmp.eq.s32.totalorder %s28, 3
      %p184 = por %p182, %p183
      %p185 = scmp.ne.s32.totalorder %s176, %s177
      %p186 = scmp.eq.s32.totalorder %s28, 0
      %p187 = por %p185, %p186
      %p188 = scmp.ne.s32.totalorder %s176, %s177
      %p189 = scmp.eq.s32.totalorder %s29, 3
      %p190 = por %p188, %p189
      %p192 = scmp.ne.s32.totalorder %s177, %s191
      %p193 = scmp.eq.s32.totalorder %s29, 0
      %p194 = por %p192, %p193
      %s195 = ssub.s32 %s30, %s42
      %s196 = ssub.s32 %s31, %s38
      %s197 = sor.u32 %s195, %s196
      %p198 = scmp.eq.s32.totalorder %s197, 0
      %s200 = sadd.s32 %s199, 1
      %s201 = scalar_select %p198, %s199, %s200
      %p204 = pneg %p198
      %p205 = scmp.eq.s32.totalorder %s23, 3
      %p206 = por %p204, %p205
      %p207 = scmp.ne.s32.totalorder %s199, %s202
      %p208 = scmp.eq.s32.totalorder %s23, 0
      %p209 = por %p207, %p208
      %p210 = scmp.ne.s32.totalorder %s199, %s202
      %p211 = scmp.eq.s32.totalorder %s28, 3
      %p212 = por %p210, %p211
      %p213 = scmp.ne.s32.totalorder %s202, %s203
      %p214 = scmp.eq.s32.totalorder %s28, 0
      %p215 = por %p213, %p214
      %p216 = scmp.ne.s32.totalorder %s202, %s203
      %p217 = scmp.eq.s32.totalorder %s29, 3
      %p218 = por %p216, %p217
      %p220 = scmp.ne.s32.totalorder %s203, %s219
      %p221 = scmp.eq.s32.totalorder %s29, 0
      %p222 = por %p220, %p221
      %p223 = scmp.le.s32.totalorder 1, %s23
      %p224 = scmp.lt.s32.totalorder %s23, 5
      %p225 = pnand %p223, %p224
      %p226 = pneg %p225
      // Predicated region
      $region9: #{tpu_custom_call.1} parent=5 // pred_check
        _
      $region10: #{tpu_custom_call.1} parent=5 // pred_check_branch
        %228 = sbr.rel (%p225) target = $region12
      $region11: #{tpu_custom_call.1} parent=5 // pred_region
        %s229 = ssub.s32 %s23, 1
        // Predicated region
        $region13: #{tpu_custom_call.1} parent=11 // pred_check
          %p230 = pneg %p82
        $region14: #{tpu_custom_call.1} parent=11 // pred_check_branch
          %232 = sbr.rel (%p230) target = $region16
        $region15: #{tpu_custom_call.1} parent=11 // pred_region
          %s234 = ssub.s32 128, 128
          %235 = vsyncadd [#allocation9], %s234
          %s236 = sshll.u32 [#allocation8], 4
          %s237 = int_to_ptr.vmem [resolvable:$true] %s236
          %242 = dma.hbm_to_vmem [thread:$0]  %s2, 128, %s237, [#allocation9], 64, 64, 4
        $region16: #{tpu_custom_call.1} parent=11 // pred_fallthru
          _
        // Predicated region
        $region17: #{tpu_custom_call.1} parent=11 // pred_check
          %p243 = pneg %p103
        $region18: #{tpu_custom_call.1} parent=11 // pred_check_branch
          %245 = sbr.rel (%p243) target = $region20
        $region19: #{tpu_custom_call.1} parent=11 // pred_region
          %s247 = ssub.s32 256, 256
          %248 = vsyncadd [#allocation9], %s247
          %s249 = sshll.u32 [#allocation10], 4
          %s250 = int_to_ptr.vmem [resolvable:$true] %s249
          %255 = dma.hbm_to_vmem [thread:$0]  %s3, 256, %s250, [#allocation9], 128, 128, 8
        $region20: #{tpu_custom_call.1} parent=11 // pred_fallthru
          _
        // Predicated region
        $region21: #{tpu_custom_call.1} parent=11 // pred_check
          %p256 = pneg %p124
        $region22: #{tpu_custom_call.1} parent=11 // pred_check_branch
          %258 = sbr.rel (%p256) target = $region24
        $region23: #{tpu_custom_call.1} parent=11 // pred_region
          %s260 = ssub.s32 256, 256
          %261 = vsyncadd [#allocation12], %s260
          %s262 = sshll.u32 [#allocation11], 4
          %s263 = int_to_ptr.vmem [resolvable:$true] %s262
          %268 = dma.hbm_to_vmem [thread:$0]  %s4, 256, %s263, [#allocation12], 128, 128, 8
        $region24: #{tpu_custom_call.1} parent=11 // pred_fallthru
          _
        // Predicated region
        $region25: #{tpu_custom_call.1} parent=11 // pred_check
          %p269 = pneg %p145
        $region26: #{tpu_custom_call.1} parent=11 // pred_check_branch
          %271 = sbr.rel (%p269) target = $region28
        $region27: #{tpu_custom_call.1} parent=11 // pred_region
          %s273 = ssub.s32 256, 256
          %274 = vsyncadd [#allocation12], %s273
          %s275 = sshll.u32 [#allocation13], 4
          %s276 = int_to_ptr.vmem [resolvable:$true] %s275
          %281 = dma.hbm_to_vmem [thread:$0]  %s5, 256, %s276, [#allocation12], 128, 128, 8
        $region28: #{tpu_custom_call.1} parent=11 // pred_fallthru
          _
        // Predicated region
        $region29: #{tpu_custom_call.1} parent=11 // pred_check
          %p282 = pneg %p166
        $region30: #{tpu_custom_call.1} parent=11 // pred_check_branch
          %284 = sbr.rel (%p282) target = $region32
        $region31: #{tpu_custom_call.1} parent=11 // pred_region
          %s286 = ssub.s32 128, 128
          %287 = vsyncadd [#allocation15], %s286
          %s288 = sshll.u32 [#allocation14], 4
          %s289 = int_to_ptr.vmem [resolvable:$true] %s288
          %294 = dma.hbm_to_vmem [thread:$0]  %s6, 128, %s289, [#allocation15], 64, 64, 4
        $region32: #{tpu_custom_call.1} parent=11 // pred_fallthru
          _
        // Predicated region
        $region33: #{tpu_custom_call.1} parent=11 // pred_check
          %p295 = pneg %p187
        $region34: #{tpu_custom_call.1} parent=11 // pred_check_branch
          %297 = sbr.rel (%p295) target = $region36
        $region35: #{tpu_custom_call.1} parent=11 // pred_region
          %s299 = ssub.s32 256, 256
          %300 = vsyncadd [#allocation15], %s299
          %s301 = sshll.u32 [#allocation16], 4
          %s302 = int_to_ptr.vmem [resolvable:$true] %s301
          %307 = dma.hbm_to_vmem [thread:$0]  %s7, 256, %s302, [#allocation15], 128, 128, 8
        $region36: #{tpu_custom_call.1} parent=11 // pred_fallthru
          _
      $region12: #{tpu_custom_call.1} parent=5 // pred_fallthru
        _
      %p308 = scmp.lt.s32.totalorder %s23, 4
      // Predicated region
      $region37: #{tpu_custom_call.1} parent=5 // pred_check
        %p309 = pneg %p308
      $region38: #{tpu_custom_call.1} parent=5 // pred_check_branch
        %311 = sbr.rel (%p309) target = $region40
      $region39: #{tpu_custom_call.1} parent=5 // pred_region
        // Predicated region
        $region41: #{tpu_custom_call.1} parent=39 // pred_check
          %p312 = pneg %p55
        $region42: #{tpu_custom_call.1} parent=39 // pred_check_branch
          %314 = sbr.rel (%p312) target = $region44
        $region43: #{tpu_custom_call.1} parent=39 // pred_region
          %s315 = sand.u32 %s45, 1
          %s316 = scalar_lea.sflag [#allocation6], %s315
          %s317 = sand.u32 %s45, 1
          %s318 = smul.addr %s317, 16
          %s319 = scalar_lea.vmem [#allocation5], %s318
          %s321 = ssub.s32 256, 256
          %322 = vsyncadd %s316, %s321
          %s323 = smul.addr %s31, 4
          %s324 = smul.addr %s323, 64
          %s325 = scalar_lea.hbm %s1, %s324
          %s326 = sshll.u32 %s319, 4
          %s327 = int_to_ptr.vmem [resolvable:$true] %s326
          %332 = dma.hbm_to_vmem [thread:$0]  %s325, 256, %s327, %s316, 128, 128, 8
        $region44: #{tpu_custom_call.1} parent=39 // pred_fallthru
          _
      $region40: #{tpu_custom_call.1} parent=5 // pred_fallthru
        _
      %p333 = scmp.le.s32.totalorder 1, %s23
      %p334 = scmp.lt.s32.totalorder %s23, 5
      %p335 = pnand %p333, %p334
      %p336 = pneg %p335
      // Predicated region
      $region45: #{tpu_custom_call.1} parent=5 // pred_check
        _
      $region46: #{tpu_custom_call.1} parent=5 // pred_check_branch
        %338 = sbr.rel (%p335) target = $region48
      $region47: #{tpu_custom_call.1} parent=5 // pred_region
        %s339 = ssub.s32 %s23, 1
        %s340 = sand.u32 %s48, 1
        %s341 = scalar_lea.sflag [#allocation6], %s340
        %s342 = sand.u32 %s48, 1
        %s343 = smul.addr %s342, 16
        %s344 = scalar_lea.vmem [#allocation5], %s343
        // Predicated region
        $region49: #{tpu_custom_call.1} parent=47 // pred_check
          %p345 = pneg %p61
        $region50: #{tpu_custom_call.1} parent=47 // pred_check_branch
          %347 = sbr.rel (%p345) target = $region52
        $region51: #{tpu_custom_call.1} parent=47 // pred_region
          %348 = dma.done %s341, 256
        $region52: #{tpu_custom_call.1} parent=47 // pred_fallthru
          _
        // Predicated region
        $region53: #{tpu_custom_call.1} parent=47 // pred_check
          %p349 = pneg %p82
        $region54: #{tpu_custom_call.1} parent=47 // pred_check_branch
          %351 = sbr.rel (%p349) target = $region56
        $region55: #{tpu_custom_call.1} parent=47 // pred_region
          %352 = dma.done [#allocation9], 128
        $region56: #{tpu_custom_call.1} parent=47 // pred_fallthru
          _
        // Predicated region
        $region57: #{tpu_custom_call.1} parent=47 // pred_check
          %p353 = pneg %p103
        $region58: #{tpu_custom_call.1} parent=47 // pred_check_branch
          %355 = sbr.rel (%p353) target = $region60
        $region59: #{tpu_custom_call.1} parent=47 // pred_region
          %356 = dma.done [#allocation9], 256
        $region60: #{tpu_custom_call.1} parent=47 // pred_fallthru
          _
        // Predicated region
        $region61: #{tpu_custom_call.1} parent=47 // pred_check
          %p357 = pneg %p124
        $region62: #{tpu_custom_call.1} parent=47 // pred_check_branch
          %359 = sbr.rel (%p357) target = $region64
        $region63: #{tpu_custom_call.1} parent=47 // pred_region
          %360 = dma.done [#allocation12], 256
        $region64: #{tpu_custom_call.1} parent=47 // pred_fallthru
          _
        // Predicated region
        $region65: #{tpu_custom_call.1} parent=47 // pred_check
          %p361 = pneg %p145
        $region66: #{tpu_custom_call.1} parent=47 // pred_check_branch
          %363 = sbr.rel (%p361) target = $region68
        $region67: #{tpu_custom_call.1} parent=47 // pred_region
          %364 = dma.done [#allocation12], 256
        $region68: #{tpu_custom_call.1} parent=47 // pred_fallthru
          _
        // Predicated region
        $region69: #{tpu_custom_call.1} parent=47 // pred_check
          %p365 = pneg %p166
        $region70: #{tpu_custom_call.1} parent=47 // pred_check_branch
          %367 = sbr.rel (%p365) target = $region72
        $region71: #{tpu_custom_call.1} parent=47 // pred_region
          %368 = dma.done [#allocation15], 128
        $region72: #{tpu_custom_call.1} parent=47 // pred_fallthru
          _
        // Predicated region
        $region73: #{tpu_custom_call.1} parent=47 // pred_check
          %p369 = pneg %p187
        $region74: #{tpu_custom_call.1} parent=47 // pred_check_branch
          %371 = sbr.rel (%p369) target = $region76
        $region75: #{tpu_custom_call.1} parent=47 // pred_region
          %372 = dma.done [#allocation15], 256
        $region76: #{tpu_custom_call.1} parent=47 // pred_fallthru
          _
        %s373 = sand.u32 %s48, 1
        %s374 = scalar_lea.sflag [#allocation6], %s373
        %s375 = sand.u32 %s48, 1
        %s376 = smul.addr %s375, 16
        %s377 = scalar_lea.vmem [#allocation5], %s376
        %p378 = pneg %p61
        %p379 = pneg %p58
        %p380 = pneg %p82
        %p381 = pneg %p79
        %p382 = pneg %p103
        %p383 = pneg %p100
        %p384 = pneg %p124
        %p385 = pneg %p121
        %p386 = pneg %p145
        %p387 = pneg %p142
        %p388 = pneg %p166
        %p389 = pneg %p163
        %p390 = pneg %p187
        %p391 = pneg %p184
        %p392 = pneg %p215
        %p393 = pneg %p212
        %s394 = sand.u32 %s202, 1
        %s395 = scalar_lea.sflag [#allocation7], %s394
        %s396 = sand.u32 %s202, 1
        %s397 = smul.addr %s396, 8
        %s398 = scalar_lea.vmem [#allocation17], %s397
        %p400 = scmp.lt.s32.totalorder %s33, 0
        %s401 = ssub.s32 0, %s33
        %s402 = scalar_select %p400, %s401, %s33
        %s403 = sand.u32 %s402, 1
        %s404 = ssub.s32 0, %s403
        %s405 = scalar_select %p400, %s404, %s403
        %p406 = scmp.ne.s32.totalorder %s405, 0
        %p407 = scmp.lt.s32.totalorder %s405, 0
        %p408 = pnand %p407, %p406
        %p409 = pneg %p408
        %s410 = sadd.s32 %s405, 2
        %s411 = scalar_select %p409, %s410, %s405
        %p412 = scmp.eq.s32.totalorder %s33, 0
        // Predicated region
        $region77: #{tpu_custom_call.1} parent=47 // pred_check
          %p413 = pneg %p412
        $region78: #{tpu_custom_call.1} parent=47 // pred_check_branch
          %415 = sbr.rel (%p413) target = $region80
        $region79: #{tpu_custom_call.1} parent=47 // pred_region
          #allocation19 [shape = 'u32[6]{0}', space=smem, size = 0x18, scoped, tag = 'DMA stride descriptor']
          %s416 = smul.u32 %s32, 6
          %s417 = sadd.s32 0, %s416
          %s418 = smul.addr %s417, 64
          %s419 = scalar_lea.hbm %s0, %s418
          %s421 = sshll.u32 1, 14
          %s422 = sxor.u32 4294967295, %s421
          %s424 = sld [smem:[#allocation0]]
          %s425 = sadd.s32 2, %s424
          %s427 = sshll.u32 7, 26
          %s428 = sxor.u32 4294967295, %s427
          %s429 = sand.u32 0, %s428
          %s430 = sshll.u32 %s425, 26
          %s431 = sor.u32 %s429, %s430
          %s432 = sshll.u32 [#allocation2], 4
          %s433 = int_to_ptr.vmem [resolvable:$true] %s432
          %436 = sst [smem:[#allocation19]] 64
          %s437 = scalar_lea.smem [#allocation19], 1
          %438 = sst [smem:[%s437]] 128
          %s439 = scalar_lea.smem [#allocation19], 2
          %440 = sst [smem:[%s439]] 2
          %s441 = scalar_lea.smem [#allocation19], 3
          %442 = sst [smem:[%s441]] 192
          %s443 = scalar_lea.smem [#allocation19], 4
          %444 = sst [smem:[%s443]] 64
          %s445 = scalar_lea.smem [#allocation19], 5
          %446 = sst [smem:[%s445]] 4
          %448 = dma.general %s419, 256, %s433, [#allocation4], [#allocation18], [#allocation19], %s431, 0
        $region80: #{tpu_custom_call.1} parent=47 // pred_fallthru
          _
        %s449 = sadd.s32 %s33, 1
        %p450 = scmp.lt.s32.totalorder %s449, 2
        // Predicated region
        $region81: #{tpu_custom_call.1} parent=47 // pred_check
          %p451 = pneg %p450
        $region82: #{tpu_custom_call.1} parent=47 // pred_check_branch
          %453 = sbr.rel (%p451) target = $region84
        $region83: #{tpu_custom_call.1} parent=47 // pred_region
          #allocation21 [shape = 'u32[6]{0}', space=smem, size = 0x18, scoped, tag = 'DMA stride descriptor']
          %s454 = ssub.s32 1, %s411
          %s455 = smul.u32 %s449, 128
          %s456 = sshra.s32 %s455, 7
          %s457 = sand.u32 %s455, 127
          %s458 = smul.u32 %s32, 6
          %s459 = sadd.s32 %s456, %s458
          %s460 = smul.addr %s459, 64
          %s461 = scalar_lea.hbm %s0, %s460
          %s462 = smul.u32 %s454, 2
          %s463 = smul.addr %s462, 8
          %s464 = scalar_lea.vmem [#allocation2], %s463
          %s465 = scalar_lea.sflag [#allocation4], %s454
          %s467 = sshll.u32 1, 14
          %s468 = sxor.u32 4294967295, %s467
          %s470 = sld [smem:[#allocation0]]
          %s471 = sadd.s32 2, %s470
          %s473 = sshll.u32 7, 26
          %s474 = sxor.u32 4294967295, %s473
          %s475 = sand.u32 0, %s474
          %s476 = sshll.u32 %s471, 26
          %s477 = sor.u32 %s475, %s476
          %s478 = sshll.u32 %s464, 4
          %s479 = int_to_ptr.vmem [resolvable:$true] %s478
          %482 = sst [smem:[#allocation21]] 64
          %s483 = scalar_lea.smem [#allocation21], 1
          %484 = sst [smem:[%s483]] 128
          %s485 = scalar_lea.smem [#allocation21], 2
          %486 = sst [smem:[%s485]] 2
          %s487 = scalar_lea.smem [#allocation21], 3
          %488 = sst [smem:[%s487]] 192
          %s489 = scalar_lea.smem [#allocation21], 4
          %490 = sst [smem:[%s489]] 64
          %s491 = scalar_lea.smem [#allocation21], 5
          %492 = sst [smem:[%s491]] 4
          %494 = dma.general %s461, 256, %s479, %s465, [#allocation20], [#allocation21], %s477, 0
        $region84: #{tpu_custom_call.1} parent=47 // pred_fallthru
          _
        %s495 = smul.u32 %s411, 2
        %s496 = smul.addr %s495, 8
        %s497 = scalar_lea.vmem [#allocation2], %s496
        %s498 = scalar_lea.sflag [#allocation4], %s411
        %s499 = smul.u32 4, 2
        %s500 = smul.u32 %s499, 2
        %s501 = sshll.u32 %s500, 4
        %502 = dma.done %s498, %s501
        %v503 = vld [vmem:[%s497] sm:$0xff]
        %v504 = vld [vmem:[%s497 + $0x8] sm:$0xff]
        %v505 = vld [vmem:[%s344] sm:$0xff]
        %v506 = vld [vmem:[%s344 + $0x8] sm:$0x11]
        %v507 = vld [vmem:[#allocation8] sm:$0xf]
        %v508 = vld [vmem:[#allocation8 + $0x4] sm:$0xf]
        %v509 = vld [vmem:[#allocation10] sm:$0xff]
        %v510 = vld [vmem:[#allocation10 + $0x8] sm:$0xff]
        %512 = vset.pattern.permute.xlu0 0
        %513 = vperm.xlu0 %512, %v509
        %v514 = vpop.permute.xlu0 %513
        %517 = vset.pattern.permute.xlu0 0
        %518 = vperm.xlu0 %517, %v510
        %v519 = vpop.permute.xlu0 %518
        %v523 = vunpack.c.l.b16 %v507
        %v524 = vunpack.c.l.b16 %v508
        %v525 = vpack.c.b16 %v524, %v523
        %vm526 = vcmask 130048
        %v528 = vsel %vm526, %v525, 0
        %530 = vmatprep.subr.bf16.mxu0 %v504
        %531 = vmatpush1.bf16.msra.mxu0 %v503
        %532 = vmatprep.subr.bf16.mxu0 0
        %533 = vmatpush1.bf16.msra.mxu0 0
        %534 = vmatprep.subr.bf16.mxu0 0
        %535 = vmatpush1.bf16.msra.mxu0 0
        %536 = vmatprep.subr.bf16.mxu0 0
        %537 = vmatpush1.bf16.msra.mxu0 0
        %538 = vmatprep.subr.bf16.mxu0 0
        %539 = vmatpush1.bf16.msra.mxu0 0
        %540 = vmatprep.subr.bf16.mxu0 0
        %541 = vmatpush1.bf16.msra.mxu0 0
        %542 = vmatprep.subr.bf16.mxu0 0
        %543 = vmatpush1.bf16.msra.mxu0 0
        %544 = vmatprep.subr.bf16.mxu0 0
        %545 = vmatpush1.bf16.msra.mxu0 0
        %546 = vmatprep.subr.bf16.mxu0 0
        %547 = vmatpush1.bf16.msra.mxu0 0
        %548 = vmatprep.subr.bf16.mxu0 0
        %549 = vmatpush1.bf16.msra.mxu0 0
        %550 = vmatprep.subr.bf16.mxu0 0
        %551 = vmatpush1.bf16.msra.mxu0 0
        %552 = vmatprep.subr.bf16.mxu0 0
        %553 = vmatpush1.bf16.msra.mxu0 0
        %554 = vmatprep.subr.bf16.mxu0 0
        %555 = vmatpush1.bf16.msra.mxu0 0
        %556 = vmatprep.subr.bf16.mxu0 0
        %557 = vmatpush1.bf16.msra.mxu0 0
        %558 = vmatprep.subr.bf16.mxu0 0
        %559 = vmatpush1.bf16.msra.mxu0 0
        %560 = vmatprep.subr.bf16.mxu0 0
        %561 = vmatpush1.bf16.msra.mxu0 0
        %562 = vmatprep.mubr.bf16.mxu0 0
        %563 = vmatmul.mubr.bf16.gmra.mrb[0].mxu0 %v528
        %v564 = vpop.f32.mrb[0].mxu0
        %v565 = vadd.f32 %v514, %v564
        %v566 = vpop.f32.mrb[0].mxu0
        %v567 = vadd.f32 %v514, %v566
        %v568 = vpop.f32.mrb[0].mxu0
        %v569 = vadd.f32 %v519, %v568
        %v570 = vpop.f32.mrb[0].mxu0
        %v571 = vadd.f32 %v519, %v570
        %572 = vdwg.mxu0
        %v573 = vmax.f32 %v565, 0.0
        %v574 = vmax.f32 %v567, 0.0
        %v575 = vmax.f32 %v569, 0.0
        %v576 = vmax.f32 %v571, 0.0
        %577 = vrot.lane.b32.xlu0 %v573, 17
        %v578 = vpop.permute.xlu0 %577
        %579 = vrot.lane.b32.xlu0 %v575, 17
        %v580 = vpop.permute.xlu0 %579
        %581 = vrot.lane.b32.xlu0 %v574, 17
        %v582 = vpop.permute.xlu0 %581
        %583 = vrot.lane.b32.xlu0 %v576, 17
        %v584 = vpop.permute.xlu0 %583
        %v585 = vlaneseq
        %v586 = vand.u32 %v585, 127
        %vm587 = vcmp.lt.s32.totalorder %v586, 17
        %v588 = vsel %vm587, %v578, %v582
        %v589 = vsel %vm587, %v580, %v584
        %v590 = vsel %vm587, %v582, %v578
        %v591 = vsel %vm587, %v584, %v580
        %v592 = vunpack.c.l.bf16 %v505
        %v593 = vunpack.c.h.bf16 %v505
        %v594 = vlaneseq
        %v595 = vshrl.u32 %v594, 7
        %v596 = vsub.s32 0, %v595
        %v597 = vrot.slane %v592, %v596
        %v598 = vlaneseq
        %v599 = vshrl.u32 %v598, 7
        %v600 = vsub.s32 0, %v599
        %v601 = vrot.slane %v593, %v600
        %v602 = vmul.f32 %v590, %v597
        %v603 = vmul.f32 %v588, %v601
        %v604 = vmul.f32 %v591, %v597
        %v605 = vmul.f32 %v589, %v601
        %v606 = vpack.c.bf16 %v604, %v602
        %v607 = vpack.c.bf16 %v605, %v603
        %608 = vst [vmem:[#allocation3] sm:$0xff] %v606
        %609 = vst [vmem:[#allocation3 + $0x8] sm:$0xff] %v607
        %610 = vrot.lane.b32.xlu0 %v573, 16
        %v611 = vpop.permute.xlu0 %610
        %612 = vrot.lane.b32.xlu0 %v575, 16
        %v613 = vpop.permute.xlu0 %612
        %614 = vrot.lane.b32.xlu0 %v574, 16
        %v615 = vpop.permute.xlu0 %614
        %616 = vrot.lane.b32.xlu0 %v576, 16
        %v617 = vpop.permute.xlu0 %616
        %vm618 = vcmp.lt.s32.totalorder %v586, 16
        %v619 = vsel %vm618, %v611, %v615
        %v620 = vsel %vm618, %v613, %v617
        %v621 = vsel %vm618, %v615, %v611
        %v622 = vsel %vm618, %v617, %v613
        %v623 = vlaneseq
        %v624 = vshrl.u32 %v623, 7
        %v625 = vsub.s32 1, %v624
        %v626 = vrot.slane %v592, %v625
        %v627 = vlaneseq
        %v628 = vshrl.u32 %v627, 7
        %v629 = vsub.s32 1, %v628
        %v630 = vrot.slane %v593, %v629
        %v631 = vmul.f32 %v621, %v626
        %v632 = vmul.f32 %v619, %v630
        %v633 = vmul.f32 %v622, %v626
        %v634 = vmul.f32 %v620, %v630
        %v635 = vpack.c.bf16 %v633, %v631
        %v636 = vpack.c.bf16 %v634, %v632
        %637 = vst [vmem:[#allocation3 + $0x10] sm:$0xff] %v635
        %638 = vst [vmem:[#allocation3 + $0x18] sm:$0xff] %v636
        %639 = vrot.lane.b32.xlu0 %v573, 15
        %v640 = vpop.permute.xlu0 %639
        %641 = vrot.lane.b32.xlu0 %v575, 15
        %v642 = vpop.permute.xlu0 %641
        %643 = vrot.lane.b32.xlu0 %v574, 15
        %v644 = vpop.permute.xlu0 %643
        %645 = vrot.lane.b32.xlu0 %v576, 15
        %v646 = vpop.permute.xlu0 %645
        %vm647 = vcmp.lt.s32.totalorder %v586, 15
        %v648 = vsel %vm647, %v640, %v644
        %v649 = vsel %vm647, %v642, %v646
        %v650 = vsel %vm647, %v644, %v640
        %v651 = vsel %vm647, %v646, %v642
        %v652 = vlaneseq
        %v653 = vshrl.u32 %v652, 7
        %v654 = vsub.s32 2, %v653
        %v655 = vrot.slane %v592, %v654
        %v656 = vlaneseq
        %v657 = vshrl.u32 %v656, 7
        %v658 = vsub.s32 2, %v657
        %v659 = vrot.slane %v593, %v658
        %v660 = vmul.f32 %v650, %v655
        %v661 = vmul.f32 %v648, %v659
        %v662 = vmul.f32 %v651, %v655
        %v663 = vmul.f32 %v649, %v659
        %v664 = vpack.c.bf16 %v662, %v660
        %v665 = vpack.c.bf16 %v663, %v661
        %666 = vst [vmem:[#allocation3 + $0x20] sm:$0xff] %v664
        %667 = vst [vmem:[#allocation3 + $0x28] sm:$0xff] %v665
        %668 = vrot.lane.b32.xlu0 %v573, 1
        %v669 = vpop.permute.xlu0 %668
        %670 = vrot.lane.b32.xlu0 %v575, 1
        %v671 = vpop.permute.xlu0 %670
        %672 = vrot.lane.b32.xlu0 %v574, 1
        %v673 = vpop.permute.xlu0 %672
        %674 = vrot.lane.b32.xlu0 %v576, 1
        %v675 = vpop.permute.xlu0 %674
        %vm676 = vcmp.lt.s32.totalorder %v586, 1
        %v677 = vsel %vm676, %v669, %v673
        %v678 = vsel %vm676, %v671, %v675
        %v679 = vsel %vm676, %v673, %v669
        %v680 = vsel %vm676, %v675, %v671
        %v681 = vlaneseq
        %v682 = vshrl.u32 %v681, 7
        %v683 = vsub.s32 3, %v682
        %v684 = vrot.slane %v592, %v683
        %v685 = vlaneseq
        %v686 = vshrl.u32 %v685, 7
        %v687 = vsub.s32 3, %v686
        %v688 = vrot.slane %v593, %v687
        %v689 = vmul.f32 %v679, %v684
        %v690 = vmul.f32 %v677, %v688
        %v691 = vmul.f32 %v680, %v684
        %v692 = vmul.f32 %v678, %v688
        %v693 = vpack.c.bf16 %v691, %v689
        %v694 = vpack.c.bf16 %v692, %v690
        %695 = vst [vmem:[#allocation3 + $0x30] sm:$0xff] %v693
        %696 = vst [vmem:[#allocation3 + $0x38] sm:$0xff] %v694
        %v697 = vpack.c.bf16 %v575, %v573
        %v698 = vpack.c.bf16 %v576, %v574
        %699 = vst [vmem:[#allocation3 + $0x40] sm:$0xff] %v697
        %700 = vst [vmem:[#allocation3 + $0x48] sm:$0xff] %v698
        %701 = vrot.lane.b32.xlu0 %v573, 127
        %v702 = vpop.permute.xlu0 %701
        %703 = vrot.lane.b32.xlu0 %v575, 127
        %v704 = vpop.permute.xlu0 %703
        %705 = vrot.lane.b32.xlu0 %v574, 127
        %v706 = vpop.permute.xlu0 %705
        %707 = vrot.lane.b32.xlu0 %v576, 127
        %v708 = vpop.permute.xlu0 %707
        %vm709 = vcmp.lt.s32.totalorder %v586, 127
        %v710 = vsel %vm709, %v702, %v706
        %v711 = vsel %vm709, %v704, %v708
        %v712 = vsel %vm709, %v706, %v702
        %v713 = vsel %vm709, %v708, %v704
        %v714 = vlaneseq
        %v715 = vshrl.u32 %v714, 7
        %v716 = vsub.s32 5, %v715
        %v717 = vrot.slane %v592, %v716
        %v718 = vlaneseq
        %v719 = vshrl.u32 %v718, 7
        %v720 = vsub.s32 5, %v719
        %v721 = vrot.slane %v593, %v720
        %v722 = vmul.f32 %v710, %v717
        %v723 = vmul.f32 %v712, %v721
        %v724 = vmul.f32 %v711, %v717
        %v725 = vmul.f32 %v713, %v721
        %v726 = vpack.c.bf16 %v724, %v722
        %v727 = vpack.c.bf16 %v725, %v723
        %728 = vst [vmem:[#allocation3 + $0x50] sm:$0xff] %v726
        %729 = vst [vmem:[#allocation3 + $0x58] sm:$0xff] %v727
        %730 = vrot.lane.b32.xlu0 %v573, 113
        %v731 = vpop.permute.xlu0 %730
        %732 = vrot.lane.b32.xlu0 %v575, 113
        %v733 = vpop.permute.xlu0 %732
        %734 = vrot.lane.b32.xlu0 %v574, 113
        %v735 = vpop.permute.xlu0 %734
        %736 = vrot.lane.b32.xlu0 %v576, 113
        %v737 = vpop.permute.xlu0 %736
        %vm738 = vcmp.lt.s32.totalorder %v586, 113
        %v739 = vsel %vm738, %v731, %v735
        %v740 = vsel %vm738, %v733, %v737
        %v741 = vsel %vm738, %v735, %v731
        %v742 = vsel %vm738, %v737, %v733
        %v743 = vlaneseq
        %v744 = vshrl.u32 %v743, 7
        %v745 = vsub.s32 6, %v744
        %v746 = vrot.slane %v592, %v745
        %v747 = vlaneseq
        %v748 = vshrl.u32 %v747, 7
        %v749 = vsub.s32 6, %v748
        %v750 = vrot.slane %v593, %v749
        %v751 = vmul.f32 %v739, %v746
        %v752 = vmul.f32 %v741, %v750
        %v753 = vmul.f32 %v740, %v746
        %v754 = vmul.f32 %v742, %v750
        %v755 = vpack.c.bf16 %v753, %v751
        %v756 = vpack.c.bf16 %v754, %v752
        %757 = vst [vmem:[#allocation3 + $0x60] sm:$0xff] %v755
        %758 = vst [vmem:[#allocation3 + $0x68] sm:$0xff] %v756
        %759 = vrot.lane.b32.xlu0 %v573, 112
        %v760 = vpop.permute.xlu0 %759
        %761 = vrot.lane.b32.xlu0 %v575, 112
        %v762 = vpop.permute.xlu0 %761
        %763 = vrot.lane.b32.xlu0 %v574, 112
        %v764 = vpop.permute.xlu0 %763
        %765 = vrot.lane.b32.xlu0 %v576, 112
        %v766 = vpop.permute.xlu0 %765
        %vm767 = vcmp.lt.s32.totalorder %v586, 112
        %v768 = vsel %vm767, %v760, %v764
        %v769 = vsel %vm767, %v762, %v766
        %v770 = vsel %vm767, %v764, %v760
        %v771 = vsel %vm767, %v766, %v762
        %v772 = vlaneseq
        %v773 = vshrl.u32 %v772, 7
        %v774 = vsub.s32 7, %v773
        %v775 = vrot.slane %v592, %v774
        %v776 = vlaneseq
        %v777 = vshrl.u32 %v776, 7
        %v778 = vsub.s32 7, %v777
        %v779 = vrot.slane %v593, %v778
        %v780 = vmul.f32 %v768, %v775
        %v781 = vmul.f32 %v770, %v779
        %v782 = vmul.f32 %v769, %v775
        %v783 = vmul.f32 %v771, %v779
        %v784 = vpack.c.bf16 %v782, %v780
        %v785 = vpack.c.bf16 %v783, %v781
        %786 = vst [vmem:[#allocation3 + $0x70] sm:$0xff] %v784
        %787 = vst [vmem:[#allocation3 + $0x78] sm:$0xff] %v785
        %788 = vrot.lane.b32.xlu0 %v573, 111
        %v789 = vpop.permute.xlu0 %788
        %790 = vrot.lane.b32.xlu0 %v575, 111
        %v791 = vpop.permute.xlu0 %790
        %792 = vrot.lane.b32.xlu0 %v574, 111
        %v793 = vpop.permute.xlu0 %792
        %794 = vrot.lane.b32.xlu0 %v576, 111
        %v795 = vpop.permute.xlu0 %794
        %vm796 = vcmp.lt.s32.totalorder %v586, 111
        %v797 = vsel %vm796, %v789, %v793
        %v798 = vsel %vm796, %v791, %v795
        %v799 = vsel %vm796, %v793, %v789
        %v800 = vsel %vm796, %v795, %v791
        %v801 = vunpack.c.l.bf16 %v506
        %v802 = vunpack.c.h.bf16 %v506
        %v803 = vlaneseq
        %v804 = vshrl.u32 %v803, 7
        %v805 = vsub.s32 0, %v804
        %v806 = vrot.slane %v801, %v805
        %v807 = vlaneseq
        %v808 = vshrl.u32 %v807, 7
        %v809 = vsub.s32 0, %v808
        %v810 = vrot.slane %v802, %v809
        %v811 = vmul.f32 %v797, %v806
        %v812 = vmul.f32 %v799, %v810
        %v813 = vmul.f32 %v798, %v806
        %v814 = vmul.f32 %v800, %v810
        %v815 = vpack.c.bf16 %v813, %v811
        %v816 = vpack.c.bf16 %v814, %v812
        %817 = vst [vmem:[#allocation3 + $0x80] sm:$0xff] %v815
        %818 = vst [vmem:[#allocation3 + $0x88] sm:$0xff] %v816
        %v819 = vld [vmem:[#allocation11] sm:$0xff]
        %v820 = vld [vmem:[#allocation11 + $0x8] sm:$0xff]
        %v821 = vld [vmem:[#allocation3] sm:$0xff]
        %v822 = vld [vmem:[#allocation3 + $0x8] sm:$0xff]
        %v823 = vld [vmem:[#allocation3 + $0x10] sm:$0xff]
        %v824 = vld [vmem:[#allocation3 + $0x18] sm:$0xff]
        %v825 = vld [vmem:[#allocation3 + $0x20] sm:$0xff]
        %v826 = vld [vmem:[#allocation3 + $0x28] sm:$0xff]
        %v827 = vld [vmem:[#allocation3 + $0x30] sm:$0xff]
        %v828 = vld [vmem:[#allocation3 + $0x38] sm:$0xff]
        %v829 = vld [vmem:[#allocation3 + $0x40] sm:$0xff]
        %v830 = vld [vmem:[#allocation3 + $0x48] sm:$0xff]
        %v831 = vld [vmem:[#allocation3 + $0x50] sm:$0xff]
        %v832 = vld [vmem:[#allocation3 + $0x58] sm:$0xff]
        %v833 = vld [vmem:[#allocation3 + $0x60] sm:$0xff]
        %v834 = vld [vmem:[#allocation3 + $0x68] sm:$0xff]
        %v835 = vld [vmem:[#allocation3 + $0x70] sm:$0xff]
        %v836 = vld [vmem:[#allocation3 + $0x78] sm:$0xff]
        %v837 = vld [vmem:[#allocation3 + $0x80] sm:$0xff]
        %v838 = vld [vmem:[#allocation3 + $0x88] sm:$0xff]
        %v839 = vld [vmem:[#allocation13] sm:$0xff]
        %v840 = vld [vmem:[#allocation13 + $0x8] sm:$0xff]
        %842 = vset.pattern.permute.xlu0 0
        %843 = vperm.xlu0 %842, %v839
        %v844 = vpop.permute.xlu0 %843
        %847 = vset.pattern.permute.xlu0 0
        %848 = vperm.xlu0 %847, %v840
        %v849 = vpop.permute.xlu0 %848
        %v853 = vunpack.c.l.b16 %v819
        %v854 = vunpack.c.h.b16 %v819
        %v855 = vunpack.c.l.b16 %v820
        %v856 = vunpack.c.h.b16 %v820
        %v857 = vpack.c.b16 %v855, %v853
        %v858 = vpack.c.b16 %v856, %v854
        %v861 = vsel %vm526, %v858, 0
        %863 = vmatprep.subr.bf16.mxu0 %v822
        %864 = vmatpush1.bf16.msra.mxu0 %v821
        %865 = vmatprep.subr.bf16.mxu0 %v824
        %866 = vmatpush1.bf16.msra.mxu0 %v823
        %867 = vmatprep.subr.bf16.mxu0 %v826
        %868 = vmatpush1.bf16.msra.mxu0 %v825
        %869 = vmatprep.subr.bf16.mxu0 %v828
        %870 = vmatpush1.bf16.msra.mxu0 %v827
        %871 = vmatprep.subr.bf16.mxu0 %v830
        %872 = vmatpush1.bf16.msra.mxu0 %v829
        %873 = vmatprep.subr.bf16.mxu0 %v832
        %874 = vmatpush1.bf16.msra.mxu0 %v831
        %875 = vmatprep.subr.bf16.mxu0 %v834
        %876 = vmatpush1.bf16.msra.mxu0 %v833
        %877 = vmatprep.subr.bf16.mxu0 %v836
        %878 = vmatpush1.bf16.msra.mxu0 %v835
        %879 = vmatprep.subr.bf16.mxu0 %v838
        %880 = vmatpush1.bf16.msra.mxu0 %v837
        %881 = vmatprep.subr.bf16.mxu0 0
        %882 = vmatpush1.bf16.msra.mxu0 0
        %883 = vmatprep.subr.bf16.mxu0 0
        %884 = vmatpush1.bf16.msra.mxu0 0
        %885 = vmatprep.subr.bf16.mxu0 0
        %886 = vmatpush1.bf16.msra.mxu0 0
        %887 = vmatprep.subr.bf16.mxu0 0
        %888 = vmatpush1.bf16.msra.mxu0 0
        %889 = vmatprep.subr.bf16.mxu0 0
        %890 = vmatpush1.bf16.msra.mxu0 0
        %891 = vmatprep.subr.bf16.mxu0 0
        %892 = vmatpush1.bf16.msra.mxu0 0
        %893 = vmatprep.subr.bf16.mxu0 0
        %894 = vmatpush1.bf16.msra.mxu0 0
        %895 = vmatprep.mubr.bf16.mxu0 %v861
        %896 = vmatmul.mubr.bf16.gmra.mrb[0].mxu0 %v857
        %v897 = vpop.f32.mrb[0].mxu0
        %v898 = vadd.f32 %v844, %v897
        %v899 = vpop.f32.mrb[0].mxu0
        %v900 = vadd.f32 %v844, %v899
        %v901 = vpop.f32.mrb[0].mxu0
        %v902 = vadd.f32 %v849, %v901
        %v903 = vpop.f32.mrb[0].mxu0
        %v904 = vadd.f32 %v849, %v903
        %905 = vdwg.mxu0
        %v906 = vmax.f32 %v898, 0.0
        %v907 = vmax.f32 %v900, 0.0
        %v908 = vmax.f32 %v902, 0.0
        %v909 = vmax.f32 %v904, 0.0
        %v910 = vld [vmem:[#allocation14] sm:$0xf]
        %v911 = vld [vmem:[#allocation14 + $0x4] sm:$0xf]
        %v912 = vpack.c.bf16 %v908, %v906
        %v913 = vpack.c.bf16 %v909, %v907
        %v914 = vld [vmem:[#allocation16] sm:$0xff]
        %v915 = vld [vmem:[#allocation16 + $0x8] sm:$0xff]
        %917 = vset.pattern.permute.xlu0 0
        %918 = vperm.xlu0 %917, %v914
        %v919 = vpop.permute.xlu0 %918
        %922 = vset.pattern.permute.xlu0 0
        %923 = vperm.xlu0 %922, %v915
        %v924 = vpop.permute.xlu0 %923
        %v928 = vunpack.c.l.b16 %v910
        %v929 = vunpack.c.l.b16 %v911
        %v930 = vpack.c.b16 %v929, %v928
        %v932 = vsel %vm526, %v930, 0
        %934 = vmatprep.subr.bf16.mxu0 %v913
        %935 = vmatpush1.bf16.msra.mxu0 %v912
        %936 = vmatprep.subr.bf16.mxu0 0
        %937 = vmatpush1.bf16.msra.mxu0 0
        %938 = vmatprep.subr.bf16.mxu0 0
        %939 = vmatpush1.bf16.msra.mxu0 0
        %940 = vmatprep.subr.bf16.mxu0 0
        %941 = vmatpush1.bf16.msra.mxu0 0
        %942 = vmatprep.subr.bf16.mxu0 0
        %943 = vmatpush1.bf16.msra.mxu0 0
        %944 = vmatprep.subr.bf16.mxu0 0
        %945 = vmatpush1.bf16.msra.mxu0 0
        %946 = vmatprep.subr.bf16.mxu0 0
        %947 = vmatpush1.bf16.msra.mxu0 0
        %948 = vmatprep.subr.bf16.mxu0 0
        %949 = vmatpush1.bf16.msra.mxu0 0
        %950 = vmatprep.subr.bf16.mxu0 0
        %951 = vmatpush1.bf16.msra.mxu0 0
        %952 = vmatprep.subr.bf16.mxu0 0
        %953 = vmatpush1.bf16.msra.mxu0 0
        %954 = vmatprep.subr.bf16.mxu0 0
        %955 = vmatpush1.bf16.msra.mxu0 0
        %956 = vmatprep.subr.bf16.mxu0 0
        %957 = vmatpush1.bf16.msra.mxu0 0
        %958 = vmatprep.subr.bf16.mxu0 0
        %959 = vmatpush1.bf16.msra.mxu0 0
        %960 = vmatprep.subr.bf16.mxu0 0
        %961 = vmatpush1.bf16.msra.mxu0 0
        %962 = vmatprep.subr.bf16.mxu0 0
        %963 = vmatpush1.bf16.msra.mxu0 0
        %964 = vmatprep.subr.bf16.mxu0 0
        %965 = vmatpush1.bf16.msra.mxu0 0
        %966 = vmatprep.mubr.bf16.mxu0 0
        %967 = vmatmul.mubr.bf16.gmra.mrb[0].mxu0 %v932
        %v968 = vpop.f32.mrb[0].mxu0
        %v969 = vadd.f32 %v919, %v968
        %v970 = vpop.f32.mrb[0].mxu0
        %v971 = vadd.f32 %v919, %v970
        %v972 = vpop.f32.mrb[0].mxu0
        %v973 = vadd.f32 %v924, %v972
        %v974 = vpop.f32.mrb[0].mxu0
        %v975 = vadd.f32 %v924, %v974
        %976 = vdwg.mxu0
        %v977 = vunpack.c.l.bf16 %v503
        %v978 = vunpack.c.l.bf16 %v504
        %v979 = vunpack.c.h.bf16 %v503
        %v980 = vunpack.c.h.bf16 %v504
        %v981 = vadd.f32 %v969, %v977
        %v982 = vadd.f32 %v971, %v978
        %v983 = vadd.f32 %v973, %v979
        %v984 = vadd.f32 %v975, %v980
        %v985 = vmax.f32 %v981, 0.0
        %v986 = vmax.f32 %v982, 0.0
        %v987 = vmax.f32 %v983, 0.0
        %v988 = vmax.f32 %v984, 0.0
        %989 = vrot.lane.b32.xlu0 %v985, 112
        %v990 = vpop.permute.xlu0 %989
        %991 = vrot.lane.b32.xlu0 %v987, 112
        %v992 = vpop.permute.xlu0 %991
        %993 = vrot.lane.b32.xlu0 %v986, 112
        %v994 = vpop.permute.xlu0 %993
        %995 = vrot.lane.b32.xlu0 %v988, 112
        %v996 = vpop.permute.xlu0 %995
        %v997 = vsel %vm767, %v990, %v994
        %v998 = vsel %vm767, %v992, %v996
        %v999 = vpack.c.bf16 %v998, %v997
        %v1001 = vunpack.c.l.b16 %v999
        %v1002 = vunpack.c.h.b16 %v999
        %v1003 = vpack.c.b16 %v1001, %v1001
        %v1004 = vpack.c.b16 %v1002, %v1002
        %1007 = vst [vmem:[%s398] sm:$0xf] %v1003
        %1008 = vst [vmem:[%s398 + $0x4] sm:$0xf] %v1004
        %s1009 = sand.u32 %s202, 1
        %s1010 = scalar_lea.sflag [#allocation7], %s1009
        %s1011 = sand.u32 %s202, 1
        %s1012 = smul.addr %s1011, 8
        %s1013 = scalar_lea.vmem [#allocation17], %s1012
        // Predicated region
        $region85: #{tpu_custom_call.1} parent=47 // pred_check
          %p1014 = pneg %p212
        $region86: #{tpu_custom_call.1} parent=47 // pred_check_branch
          %1016 = sbr.rel (%p1014) target = $region88
        $region87: #{tpu_custom_call.1} parent=47 // pred_region
          %s1018 = ssub.s32 128, 128
          %1019 = vsyncadd %s1010, %s1018
          %s1020 = smul.addr %s32, 4
          %s1021 = sadd.s32 %s33, %s1020
          %s1022 = smul.addr %s1021, 64
          %s1023 = scalar_lea.hbm %s8, %s1022
          %s1024 = sshll.u32 %s1013, 4
          %s1025 = int_to_ptr.vmem [resolvable:$true] %s1024
          %1030 = dma.vmem_to_hbm [thread:$0]  %s1025, 128, %s1023, %s1010, 64, 128, 4
        $region88: #{tpu_custom_call.1} parent=47 // pred_fallthru
          _
      $region48: #{tpu_custom_call.1} parent=5 // pred_fallthru
        _
      %p1031 = scmp.le.s32.totalorder 2, %s23
      // Predicated region
      $region89: #{tpu_custom_call.1} parent=5 // pred_check
        %p1032 = pneg %p1031
      $region90: #{tpu_custom_call.1} parent=5 // pred_check_branch
        %1034 = sbr.rel (%p1032) target = $region92
      $region91: #{tpu_custom_call.1} parent=5 // pred_region
        %s1035 = ssub.s32 %s23, 2
        // Predicated region
        $region93: #{tpu_custom_call.1} parent=91 // pred_check
          %p1036 = pneg %p218
        $region94: #{tpu_custom_call.1} parent=91 // pred_check_branch
          %1038 = sbr.rel (%p1036) target = $region96
        $region95: #{tpu_custom_call.1} parent=91 // pred_region
          %s1039 = sand.u32 %s203, 1
          %s1040 = scalar_lea.sflag [#allocation7], %s1039
          %s1041 = sand.u32 %s203, 1
          %s1042 = smul.addr %s1041, 8
          %s1043 = scalar_lea.vmem [#allocation17], %s1042
          %1044 = dma.done %s1040, 128
        $region96: #{tpu_custom_call.1} parent=91 // pred_fallthru
          _
      $region92: #{tpu_custom_call.1} parent=5 // pred_fallthru
        _
    $region6: #{tpu_custom_call.1} parent=1 // loop_footer
      %s27 = sadd.s32 1, %s23
    $region7: #{tpu_custom_call.1} parent=1 // loop_footer_branch
      %22 = sbr.rel target = $region3
    $region8: #{tpu_custom_call.1} parent=1 // loop_exit
      _
    %1045 = vsyncpa [#allocation6], 1
    %s1046 = scalar_lea.sflag [#allocation6], 1
    %1047 = vsyncpa %s1046, 1
    %1048 = vsyncpa [#allocation9], 1
    %1049 = vsyncpa [#allocation12], 1
    %1050 = vsyncpa [#allocation15], 1
    %1051 = vsyncpa [#allocation7], 1
    %s1052 = scalar_lea.sflag [#allocation7], 1
    %1053 = vsyncpa %s1052, 1
  %1054 = vsyncmov [#allocation4]
  %s1055 = vpop.sfrf %1054
  %p1056 = scmp.eq.s32.totalorder %s1055, 0
  %p1057 = pneg %p1056
  %1059 = shalt.err (%p1057)
  %s1060 = scalar_lea.sflag [#allocation4], 1
  %1061 = vsyncmov %s1060
  %s1062 = vpop.sfrf %1061
  %p1063 = scmp.eq.s32.totalorder %s1062, 0
  %p1064 = pneg %p1063
  %1066 = shalt.err (%p1064)

</llo_original>
